<compile_context>
chip_gen: v5e
topology: v5e:2x2
jax: 0.10.0
libtpu: 0.0.40
codegen_flags: <defaults>
</compile_context>

<pallas_src>
import math

import jax
import jax.numpy as jnp
from jax import lax
from jax.experimental import pallas as pl
from jax.experimental.pallas import tpu as pltpu


def _phase_weights(w_hwio):
    """Fold the nearest-2x upsample into the 3x3 conv weights.

    Returns (4, 4*Cin, Cout), packed as [phase 2a+b, (2*ty+tx)*Cin + cin, cout]:
      y[n, 2p+a, 2q+b, :] = bias
        + sum_{ty,tx in {0,1}} x_pad[n, p+a+ty, q+b+tx, :] @ pw[2a+b, tap(ty,tx)]
    where x_pad is the ORIGINAL (1x) image with a 1-pixel zero ring.
    """
    cin, cout = w_hwio.shape[2], w_hwio.shape[3]
    phases = []
    for a in (0, 1):
        for b in (0, 1):
            taps = []
            for ty in (0, 1):
                for tx in (0, 1):
                    acc = jnp.zeros((cin, cout), w_hwio.dtype)
                    for ky in range(3):
                        for kx in range(3):
                            if ((ky + 1 - a) // 2 == ty
                                    and (kx + 1 - b) // 2 == tx):
                                acc = acc + w_hwio[ky, kx]
                    taps.append(acc)
            phases.append(jnp.concatenate(taps, axis=0))       # (4*Cin, Cout)
    return jnp.stack(phases, axis=0)                           # (4, 4*Cin, Cout)


def _upsample_conv2x_kernel(xm_ref, xh_ref, pw_ref, b_ref, out_ref):
    """Fused nearest-2x upsample + 3x3 conv for one haloed row tile.

    xm_ref : (1, TH, W+2, Cin)   rows [i*TH, i*TH+TH) of the zero-padded 1x input
    xh_ref : (1, 2,  W+2, Cin)   2-row bottom halo (rows [i*TH+TH, i*TH+TH+2))
    pw_ref : (4, 4*Cin, Cout)    phase-packed weights (tap-major along K)
    b_ref  : (1, Cout)           bias, float32
    out_ref: (1, 4, TH, W, Cout) four output phases, ph = 2*a + b
    """
    _, _, TH, W, Cout = out_ref.shape
    Cin = xm_ref.shape[-1]

    # Full haloed tile in VMEM: one cheap major-axis concat, (TH+2, W+2, Cin).
    tile = jnp.concatenate([xm_ref[0], xh_ref[0]], axis=0)
    bias = b_ref[...].astype(jnp.float32)                      # (1, Cout)

    # For each column phase b, pack all four 2x2 taps along the channel axis ONCE:
    #   Qb[y, q, (2*ty+tx)*Cin + c] = tile[y + ty, q + b + tx, c]
    # Row shifts (ty, and later the a-shift) are free major-axis slices; only the
    # column-shifted slices feeding this concat materialize copies.  Each phase is
    # then a single MXU matmul with contraction depth K = 4*Cin.
    for b in (0, 1):
        qb = jnp.concatenate(
            [tile[ty:ty + TH + 1, b + tx:b + tx + W, :]
             for ty in (0, 1) for tx in (0, 1)],
            axis=-1)                                            # (TH+1, W, 4*Cin)
        for a in (0, 1):
            ph = 2 * a + b
            op = qb[a:a + TH].reshape(TH * W, 4 * Cin)          # free row slice/view
            acc = jnp.dot(op, pw_ref[ph],
                          preferred_element_type=jnp.float32)   # (TH*W, Cout) f32
            acc = acc + bias                                    # one VPU add / phase
            out_ref[0, ph] = acc.reshape(TH, W, Cout).astype(out_ref.dtype)


def _vmem_budget_and_limit():
    """Generation-aware VMEM working-set budget and Mosaic scoped-VMEM limit."""
    cap = 64 * 1024 * 1024                       # v7x per-core physical (worst case)
    try:
        cap = int(pltpu.get_tpu_info().vmem_capacity_bytes)
    except Exception:
        pass
    budget = (cap * 3) // 8                      # tile-picking working-set target
    limit = min((cap * 3) // 4, 100 * 1024 * 1024)
    return budget, max(limit, 32 * 1024 * 1024)


def _pick_tile_h(H, W, Cin, Cout, in_itemsize, out_itemsize, budget_bytes,
                 min_tiles=1):
    """Largest even row tile (divisor of H) whose full working set fits the budget.

    Counts double-buffered input/halo/weight/output blocks AND the in-kernel
    temporaries (haloed-tile concat, two packed-tap buffers, f32 accumulators).
    """
    Wp = W + 2
    w_bytes = 2 * 16 * Cin * Cout * in_itemsize          # weights, double-buffered

    def fits(th):
        main = 2 * th * Wp * Cin * in_itemsize           # input block, 2 buffers
        halo = 2 * 2 * Wp * Cin * in_itemsize
        outb = 2 * 4 * th * W * Cout * out_itemsize      # 4 phases, 2 buffers
        tile = (th + 2) * Wp * Cin * in_itemsize         # in-kernel haloed concat
        qbuf = 2 * (th + 1) * W * 4 * Cin * in_itemsize  # Q_0, Q_1 packed operands
        accb = 2 * th * W * Cout * 4                     # live f32 accumulators
        return main + halo + outb + w_bytes + tile + qbuf + accb <= budget_bytes

    def best_for(min_t):
        best = None
        for th in range(2, H + 1, 2):
            if H % th or (H // th) < min_t:
                continue
            if fits(th):
                best = th
        return best

    th = best_for(min_tiles)
    if th is None and min_tiles > 1:
        th = best_for(1)                 # cannot honor min_tiles; drop it
    if th is None:
        th = 2                           # nothing fits: smallest tile + VMEM limit
    return th


def upsample2x_conv3x3_pallas(x_nhwc, pw_packed, bias, *, out_dtype=None,
                              compute_dtype=None):
    """Fused nearest-2x upsample + 3x3 'same' conv (NHWC in, phase-major out).

    x_nhwc:    (N, H, W, Cin) ORIGINAL (pre-upsample) image, channels-last.
    pw_packed: (4, 4*Cin, Cout) from _phase_weights.
    bias:      (Cout,)
    Returns    (N, 4, H, W, Cout): y_up[n, 2p+a, 2q+b, :] == out[n, 2a+b, p, q, :].
    """
    N, H, W, Cin = x_nhwc.shape
    Cout = pw_packed.shape[-1]
    out_dtype = out_dtype or x_nhwc.dtype
    cdt = compute_dtype or x_nhwc.dtype

    xw = x_nhwc.astype(cdt)
    pw = pw_packed.astype(cdt)
    bias2 = bias.reshape(1, Cout).astype(jnp.float32)

    # Row tiles carry a 2-row bottom halo.  Keeping TH even makes every halo
    # start even, so the halo can come from a second, 2-row-blocked BlockSpec on
    # the SAME padded array -- no HBM halo-duplication pass.
    H_eff = H + (H % 2)
    xp = jnp.pad(xw, ((0, 0), (1, 1 + (H_eff - H)), (1, 1), (0, 0)))
    Wp = W + 2
    K4 = 4 * Cin

    budget, vmem_limit = _vmem_budget_and_limit()
    TH = _pick_tile_h(H_eff, W, Cin, Cout,
                      in_itemsize=jnp.dtype(cdt).itemsize,
                      out_itemsize=jnp.dtype(out_dtype).itemsize,
                      budget_bytes=budget,
                      min_tiles=2 if N == 1 else 1)   # keep both v7x cores busy
    T = H_eff // TH

    out = pl.pallas_call(
        _upsample_conv2x_kernel,
        out_shape=jax.ShapeDtypeStruct((N, 4, H_eff, W, Cout), out_dtype),
        grid_spec=pltpu.PrefetchScalarGridSpec(
            num_scalar_prefetch=0,
            grid=(N, T),
            in_specs=[
                # main TH rows of the padded 1x image
                pl.BlockSpec((1, TH, Wp, Cin), lambda n, i: (n, i, 0, 0)),
                # 2-row bottom halo; same array, row-blocked by 2
                pl.BlockSpec((1, 2, Wp, Cin),
                             lambda n, i: (n, i * (TH // 2) + TH // 2, 0, 0)),
                pl.BlockSpec((4, K4, Cout), lambda n, i: (0, 0, 0)),
                pl.BlockSpec((1, Cout), lambda n, i: (0, 0)),
            ],
            out_specs=pl.BlockSpec((1, 4, TH, W, Cout),
                                   lambda n, i: (n, 0, i, 0, 0)),
        ),
        compiler_params=pltpu.CompilerParams(
            dimension_semantics=("parallel", "parallel"),
            vmem_limit_bytes=vmem_limit),
    )(xp, xp, pw, bias2)

    if H_eff != H:
        out = out[:, :, :H]
    return out


class UpsamplePallas:
    """JAX/Pallas port of diffae Upsample (dims=2).  NCHW in / NCHW out.

    compute_dtype=jnp.bfloat16 (default) feeds the MXU bf16 operands with f32
    accumulation (native on v5e/v6e/v7x, halves HBM/VMEM for tiles and weights);
    pass jnp.float32 for exact numerical parity with the PyTorch module.
    """

    def __init__(self, channels, use_conv, dims=2, out_channels=None, key=None,
                 compute_dtype=jnp.bfloat16):
        assert dims == 2, "only dims=2 implemented"
        # TODO(synk): dims=1 and dims=3 variants (1D/3D conv) not implemented.
        self.channels = channels
        self.out_channels = out_channels or channels
        self.use_conv = use_conv
        self.dims = dims
        self.compute_dtype = compute_dtype
        if use_conv:
            key = key if key is not None else jax.random.PRNGKey(0)
            kw, kb = jax.random.split(key)
            fan_in = channels * 3 * 3
            bound = 1.0 / math.sqrt(fan_in)          # PyTorch Conv2d default init
            w_oihw = jax.random.uniform(kw, (self.out_channels, channels, 3, 3),
                                        minval=-bound, maxval=bound,
                                        dtype=jnp.float32)
            self.w_hwio = jnp.transpose(w_oihw, (2, 3, 1, 0))   # (3,3,Cin,Cout)
            self.bias = jax.random.uniform(kb, (self.out_channels,),
                                           minval=-bound, maxval=bound,
                                           dtype=jnp.float32)
            # Nearest-2x upsample folded into the conv: 4 phases, each a single
            # MXU matmul with the 2x2 taps packed tap-major along K = 4*Cin.
            self.pw_packed = _phase_weights(self.w_hwio)        # (4, 4*Cin, Cout)

    def apply_nhwc(self, x_nhwc, out_dtype=None):
        """Channels-last fast path (skips the NCHW boundary transposes)."""
        N, H, W, _ = x_nhwc.shape
        C = self.out_channels
        phases = upsample2x_conv3x3_pallas(
            x_nhwc, self.pw_packed, self.bias,
            out_dtype=out_dtype or x_nhwc.dtype,
            compute_dtype=self.compute_dtype)                   # (N,4,H,W,C)
        y = phases.reshape(N, 2, 2, H, W, C)
        y = jnp.transpose(y, (0, 3, 1, 4, 2, 5))                # (N,H,2,W,2,C)
        return y.reshape(N, 2 * H, 2 * W, C)

    def __call__(self, x_nchw):
        assert x_nchw.shape[1] == self.channels
        N, _, H, W = x_nchw.shape
        if not self.use_conv:
            # Pure nearest-2x upsample: plain data duplication, no kernel needed.
            return jnp.repeat(jnp.repeat(x_nchw, 2, axis=2), 2, axis=3)
        # NCHW <-> NHWC only at the module boundary.  A channels-last model
        # should call apply_nhwc() and skip both transposes (each is an extra
        # HBM round trip over the 4x-expanded tensor).
        x = jnp.transpose(x_nchw, (0, 2, 3, 1))
        phases = upsample2x_conv3x3_pallas(
            x, self.pw_packed, self.bias, out_dtype=x_nchw.dtype,
            compute_dtype=self.compute_dtype)                   # (N,4,H,W,Cout)
        # Single pass over the 4x output: interleave phases AND restore NCHW.
        y = phases.reshape(N, 2, 2, H, W, self.out_channels)
        y = jnp.transpose(y, (0, 5, 3, 1, 4, 2))                # (N,C,H,2,W,2)
        return y.reshape(N, self.out_channels, 2 * H, 2 * W)


if __name__ == "__main__":
    key = jax.random.PRNGKey(0)
    kx, kp = jax.random.split(key)

    B, C, H, W = 2, 4, 16, 16
    x = jax.random.normal(kx, (B, C, H, W), dtype=jnp.float32)

    # --- f32-operand instance: strict check of the phase-folded algorithm. ---
    mod = UpsamplePallas(channels=C, use_conv=True, dims=2, key=kp,
                         compute_dtype=jnp.float32)
    y = jax.block_until_ready(mod(x))
    assert y.shape == (B, mod.out_channels, 2 * H, 2 * W), y.shape

    # Pure-JAX reference: explicit nearest-2x upsample + 3x3 'same' conv.
    x_nhwc = jnp.transpose(x, (0, 2, 3, 1))
    up = jnp.repeat(jnp.repeat(x_nhwc, 2, axis=1), 2, axis=2)
    y_ref = lax.conv_general_dilated(
        up, mod.w_hwio, window_strides=(1, 1), padding="SAME",
        dimension_numbers=("NHWC", "HWIO", "NHWC")) + mod.bias
    y_ref = jnp.transpose(y_ref, (0, 3, 1, 2))
    err = float(jnp.max(jnp.abs(y - y_ref)))
    assert jnp.allclose(y, y_ref, rtol=1e-3, atol=1e-3), err

    # --- batch=1 exercises the forced >=2 row tiles (megacore) path. ---
    y1 = jax.block_until_ready(mod(x[:1]))
    err1 = float(jnp.max(jnp.abs(y1 - y_ref[:1])))
    assert jnp.allclose(y1, y_ref[:1], rtol=1e-3, atol=1e-3), err1

    # --- channels-last fast path. ---
    y_nhwc = jax.block_until_ready(mod.apply_nhwc(x_nhwc))
    err_nhwc = float(jnp.max(jnp.abs(jnp.transpose(y_nhwc, (0, 3, 1, 2)) - y_ref)))
    assert jnp.allclose(jnp.transpose(y_nhwc, (0, 3, 1, 2)), y_ref,
                        rtol=1e-3, atol=1e-3), err_nhwc

    # --- default bf16-operand instance (f32 accumulation): loose tolerance. ---
    mod_bf16 = UpsamplePallas(channels=C, use_conv=True, dims=2, key=kp)
    y_bf = jax.block_until_ready(mod_bf16(x))
    err_bf = float(jnp.max(jnp.abs(y_bf - y_ref)))
    assert jnp.allclose(y_bf, y_ref, rtol=5e-2, atol=2e-1), err_bf

    # --- use_conv=False path (pure nearest upsample). ---
    mod2 = UpsamplePallas(channels=C, use_conv=False, dims=2)
    y2 = jax.block_until_ready(mod2(x))
    assert y2.shape == (B, C, 2 * H, 2 * W)
    assert jnp.array_equal(y2, jnp.repeat(jnp.repeat(x, 2, axis=2), 2, axis=3))

    print("KERNEL_OK")
</pallas_src>

<mosaic_0001>
module attributes {stable_mosaic.version = 11 : i64} {
  func.func @_upsample_conv2x_kernel(%arg0: i32, %arg1: i32, %arg2: memref<1x16x18x4xf32, #tpu.memory_space<vmem>>, %arg3: memref<1x2x18x4xf32, #tpu.memory_space<vmem>>, %arg4: memref<4x16x4xf32, #tpu.memory_space<vmem>>, %arg5: memref<1x4xf32, #tpu.memory_space<vmem>>, %arg6: memref<1x4x16x16x4xf32, #tpu.memory_space<vmem>>) attributes {dimension_semantics = [#tpu.dimension_semantics<parallel>, #tpu.dimension_semantics<parallel>], iteration_bounds = array<i64: 2, 1>, scalar_prefetch = 0 : i64, scratch_operands = 0 : i64, tpu.core_type = #tpu.core_type<tc>, window_params = [{transform_indices = @transform_0, window_bounds = array<i64: 1, 16, 18, 4>}, {transform_indices = @transform_1, window_bounds = array<i64: 1, 2, 18, 4>}, {pipeline_mode = #tpu.pipeline_mode<synchronous>, transform_indices = @transform_2, window_bounds = array<i64: 4, 16, 4>}, {pipeline_mode = #tpu.pipeline_mode<synchronous>, transform_indices = @transform_3, window_bounds = array<i64: 1, 4>}, {transform_indices = @transform_4, window_bounds = array<i64: 1, 4, 16, 16, 4>}]} {
    %c0 = arith.constant 0 : index
    %c0_0 = arith.constant 0 : index
    %c0_1 = arith.constant 0 : index
    %c0_2 = arith.constant 0 : index
    %0 = vector.load %arg2[%c0, %c0_0, %c0_1, %c0_2] : memref<1x16x18x4xf32, #tpu.memory_space<vmem>>, vector<1x16x18x4xf32>
    %1 = vector.shape_cast %0 : vector<1x16x18x4xf32> to vector<16x18x4xf32>
    %c0_3 = arith.constant 0 : index
    %c0_4 = arith.constant 0 : index
    %c0_5 = arith.constant 0 : index
    %c0_6 = arith.constant 0 : index
    %2 = vector.load %arg3[%c0_3, %c0_4, %c0_5, %c0_6] : memref<1x2x18x4xf32, #tpu.memory_space<vmem>>, vector<1x2x18x4xf32>
    %3 = vector.shape_cast %2 : vector<1x2x18x4xf32> to vector<2x18x4xf32>
    %4 = tpu.concatenate %1, %3 in 0 : vector<16x18x4xf32>, vector<2x18x4xf32> -> vector<18x18x4xf32>
    %c0_7 = arith.constant 0 : index
    %c0_8 = arith.constant 0 : index
    %5 = vector.load %arg5[%c0_7, %c0_8] : memref<1x4xf32, #tpu.memory_space<vmem>>, vector<1x4xf32>
    %6 = vector.extract_strided_slice %4 {offsets = [0, 0, 0], sizes = [17, 16, 4], strides = [1, 1, 1]} : vector<18x18x4xf32> to vector<17x16x4xf32>
    %7 = vector.extract_strided_slice %4 {offsets = [0, 1, 0], sizes = [17, 16, 4], strides = [1, 1, 1]} : vector<18x18x4xf32> to vector<17x16x4xf32>
    %8 = vector.extract_strided_slice %4 {offsets = [1, 0, 0], sizes = [17, 16, 4], strides = [1, 1, 1]} : vector<18x18x4xf32> to vector<17x16x4xf32>
    %9 = vector.extract_strided_slice %4 {offsets = [1, 1, 0], sizes = [17, 16, 4], strides = [1, 1, 1]} : vector<18x18x4xf32> to vector<17x16x4xf32>
    %10 = tpu.concatenate %6, %7, %8, %9 in 2 : vector<17x16x4xf32>, vector<17x16x4xf32>, vector<17x16x4xf32>, vector<17x16x4xf32> -> vector<17x16x16xf32>
    %11 = vector.extract_strided_slice %10 {offsets = [0, 0, 0], sizes = [16, 16, 16], strides = [1, 1, 1]} : vector<17x16x16xf32> to vector<16x16x16xf32>
    %12 = vector.shape_cast %11 : vector<16x16x16xf32> to vector<256x16xf32>
    %c0_9 = arith.constant 0 : index
    %c0_10 = arith.constant 0 : index
    %c0_11 = arith.constant 0 : index
    %13 = vector.load %arg4[%c0_9, %c0_10, %c0_11] : memref<4x16x4xf32, #tpu.memory_space<vmem>>, vector<1x16x4xf32>
    %14 = vector.shape_cast %13 : vector<1x16x4xf32> to vector<16x4xf32>
    %cst = arith.constant dense<0.000000e+00> : vector<256x4xf32>
    %15 = tpu.matmul %12, %14, %cst {dimension_numbers = #tpu.dot_dimension_numbers<[1], [0], [0], [1], [0, 0, 1, 1], [], []>} : vector<256x16xf32>, vector<16x4xf32>, vector<256x4xf32> -> vector<256x4xf32>
    %16 = vector.broadcast %5 : vector<1x4xf32> to vector<256x4xf32>
    %17 = arith.addf %15, %16 : vector<256x4xf32>
    %18 = vector.shape_cast %17 : vector<256x4xf32> to vector<16x16x4xf32>
    %c0_12 = arith.constant 0 : index
    %c0_13 = arith.constant 0 : index
    %c0_14 = arith.constant 0 : index
    %c0_15 = arith.constant 0 : index
    %c0_16 = arith.constant 0 : index
    %19 = vector.load %arg6[%c0_12, %c0_13, %c0_14, %c0_15, %c0_16] : memref<1x4x16x16x4xf32, #tpu.memory_space<vmem>>, vector<1x1x16x16x4xf32>
    %20 = vector.shape_cast %19 : vector<1x1x16x16x4xf32> to vector<16x16x4xf32>
    %21 = vector.shape_cast %18 : vector<16x16x4xf32> to vector<1x1x16x16x4xf32>
    tpu.vector_store %arg6[%c0_12, %c0_13, %c0_14, %c0_15, %c0_16], %21 {strides = array<i32>} : memref<1x4x16x16x4xf32, #tpu.memory_space<vmem>>, vector<1x1x16x16x4xf32>,
    %22 = vector.extract_strided_slice %10 {offsets = [1, 0, 0], sizes = [16, 16, 16], strides = [1, 1, 1]} : vector<17x16x16xf32> to vector<16x16x16xf32>
    %23 = vector.shape_cast %22 : vector<16x16x16xf32> to vector<256x16xf32>
    %c2 = arith.constant 2 : index
    %c0_17 = arith.constant 0 : index
    %c0_18 = arith.constant 0 : index
    %24 = vector.load %arg4[%c2, %c0_17, %c0_18] : memref<4x16x4xf32, #tpu.memory_space<vmem>>, vector<1x16x4xf32>
    %25 = vector.shape_cast %24 : vector<1x16x4xf32> to vector<16x4xf32>
    %cst_19 = arith.constant dense<0.000000e+00> : vector<256x4xf32>
    %26 = tpu.matmul %23, %25, %cst_19 {dimension_numbers = #tpu.dot_dimension_numbers<[1], [0], [0], [1], [0, 0, 1, 1], [], []>} : vector<256x16xf32>, vector<16x4xf32>, vector<256x4xf32> -> vector<256x4xf32>
    %27 = vector.broadcast %5 : vector<1x4xf32> to vector<256x4xf32>
    %28 = arith.addf %26, %27 : vector<256x4xf32>
    %29 = vector.shape_cast %28 : vector<256x4xf32> to vector<16x16x4xf32>
    %c0_20 = arith.constant 0 : index
    %c2_21 = arith.constant 2 : index
    %c0_22 = arith.constant 0 : index
    %c0_23 = arith.constant 0 : index
    %c0_24 = arith.constant 0 : index
    %30 = vector.load %arg6[%c0_20, %c2_21, %c0_22, %c0_23, %c0_24] : memref<1x4x16x16x4xf32, #tpu.memory_space<vmem>>, vector<1x1x16x16x4xf32>
    %31 = vector.shape_cast %30 : vector<1x1x16x16x4xf32> to vector<16x16x4xf32>
    %32 = vector.shape_cast %29 : vector<16x16x4xf32> to vector<1x1x16x16x4xf32>
    tpu.vector_store %arg6[%c0_20, %c2_21, %c0_22, %c0_23, %c0_24], %32 {strides = array<i32>} : memref<1x4x16x16x4xf32, #tpu.memory_space<vmem>>, vector<1x1x16x16x4xf32>,
    %33 = vector.extract_strided_slice %4 {offsets = [0, 1, 0], sizes = [17, 16, 4], strides = [1, 1, 1]} : vector<18x18x4xf32> to vector<17x16x4xf32>
    %34 = vector.extract_strided_slice %4 {offsets = [0, 2, 0], sizes = [17, 16, 4], strides = [1, 1, 1]} : vector<18x18x4xf32> to vector<17x16x4xf32>
    %35 = vector.extract_strided_slice %4 {offsets = [1, 1, 0], sizes = [17, 16, 4], strides = [1, 1, 1]} : vector<18x18x4xf32> to vector<17x16x4xf32>
    %36 = vector.extract_strided_slice %4 {offsets = [1, 2, 0], sizes = [17, 16, 4], strides = [1, 1, 1]} : vector<18x18x4xf32> to vector<17x16x4xf32>
    %37 = tpu.concatenate %33, %34, %35, %36 in 2 : vector<17x16x4xf32>, vector<17x16x4xf32>, vector<17x16x4xf32>, vector<17x16x4xf32> -> vector<17x16x16xf32>
    %38 = vector.extract_strided_slice %37 {offsets = [0, 0, 0], sizes = [16, 16, 16], strides = [1, 1, 1]} : vector<17x16x16xf32> to vector<16x16x16xf32>
    %39 = vector.shape_cast %38 : vector<16x16x16xf32> to vector<256x16xf32>
    %c1 = arith.constant 1 : index
    %c0_25 = arith.constant 0 : index
    %c0_26 = arith.constant 0 : index
    %40 = vector.load %arg4[%c1, %c0_25, %c0_26] : memref<4x16x4xf32, #tpu.memory_space<vmem>>, vector<1x16x4xf32>
    %41 = vector.shape_cast %40 : vector<1x16x4xf32> to vector<16x4xf32>
    %cst_27 = arith.constant dense<0.000000e+00> : vector<256x4xf32>
    %42 = tpu.matmul %39, %41, %cst_27 {dimension_numbers = #tpu.dot_dimension_numbers<[1], [0], [0], [1], [0, 0, 1, 1], [], []>} : vector<256x16xf32>, vector<16x4xf32>, vector<256x4xf32> -> vector<256x4xf32>
    %43 = vector.broadcast %5 : vector<1x4xf32> to vector<256x4xf32>
    %44 = arith.addf %42, %43 : vector<256x4xf32>
    %45 = vector.shape_cast %44 : vector<256x4xf32> to vector<16x16x4xf32>
    %c0_28 = arith.constant 0 : index
    %c1_29 = arith.constant 1 : index
    %c0_30 = arith.constant 0 : index
    %c0_31 = arith.constant 0 : index
    %c0_32 = arith.constant 0 : index
    %46 = vector.load %arg6[%c0_28, %c1_29, %c0_30, %c0_31, %c0_32] : memref<1x4x16x16x4xf32, #tpu.memory_space<vmem>>, vector<1x1x16x16x4xf32>
    %47 = vector.shape_cast %46 : vector<1x1x16x16x4xf32> to vector<16x16x4xf32>
    %48 = vector.shape_cast %45 : vector<16x16x4xf32> to vector<1x1x16x16x4xf32>
    tpu.vector_store %arg6[%c0_28, %c1_29, %c0_30, %c0_31, %c0_32], %48 {strides = array<i32>} : memref<1x4x16x16x4xf32, #tpu.memory_space<vmem>>, vector<1x1x16x16x4xf32>,
    %49 = vector.extract_strided_slice %37 {offsets = [1, 0, 0], sizes = [16, 16, 16], strides = [1, 1, 1]} : vector<17x16x16xf32> to vector<16x16x16xf32>
    %50 = vector.shape_cast %49 : vector<16x16x16xf32> to vector<256x16xf32>
    %c3 = arith.constant 3 : index
    %c0_33 = arith.constant 0 : index
    %c0_34 = arith.constant 0 : index
    %51 = vector.load %arg4[%c3, %c0_33, %c0_34] : memref<4x16x4xf32, #tpu.memory_space<vmem>>, vector<1x16x4xf32>
    %52 = vector.shape_cast %51 : vector<1x16x4xf32> to vector<16x4xf32>
    %cst_35 = arith.constant dense<0.000000e+00> : vector<256x4xf32>
    %53 = tpu.matmul %50, %52, %cst_35 {dimension_numbers = #tpu.dot_dimension_numbers<[1], [0], [0], [1], [0, 0, 1, 1], [], []>} : vector<256x16xf32>, vector<16x4xf32>, vector<256x4xf32> -> vector<256x4xf32>
    %54 = vector.broadcast %5 : vector<1x4xf32> to vector<256x4xf32>
    %55 = arith.addf %53, %54 : vector<256x4xf32>
    %56 = vector.shape_cast %55 : vector<256x4xf32> to vector<16x16x4xf32>
    %c0_36 = arith.constant 0 : index
    %c3_37 = arith.constant 3 : index
    %c0_38 = arith.constant 0 : index
    %c0_39 = arith.constant 0 : index
    %c0_40 = arith.constant 0 : index
    %57 = vector.load %arg6[%c0_36, %c3_37, %c0_38, %c0_39, %c0_40] : memref<1x4x16x16x4xf32, #tpu.memory_space<vmem>>, vector<1x1x16x16x4xf32>
    %58 = vector.shape_cast %57 : vector<1x1x16x16x4xf32> to vector<16x16x4xf32>
    %59 = vector.shape_cast %56 : vector<16x16x4xf32> to vector<1x1x16x16x4xf32>
    tpu.vector_store %arg6[%c0_36, %c3_37, %c0_38, %c0_39, %c0_40], %59 {strides = array<i32>} : memref<1x4x16x16x4xf32, #tpu.memory_space<vmem>>, vector<1x1x16x16x4xf32>,
    return
  }
  func.func @transform_0(%arg0: i32, %arg1: i32) -> (i32, i32, i32, i32) {
    %c0_i32 = arith.constant 0 : i32
    %c0_i32_0 = arith.constant 0 : i32
    %c0_i32_1 = arith.constant 0 : i32
    return %arg0, %arg1, %c0_i32, %c0_i32_0 : i32, i32, i32, i32
  }
  func.func @transform_1(%arg0: i32, %arg1: i32) -> (i32, i32, i32, i32) {
    %c8_i32 = arith.constant 8 : i32
    %0 = arith.muli %arg1, %c8_i32 : i32
    %c8_i32_0 = arith.constant 8 : i32
    %1 = arith.addi %0, %c8_i32_0 : i32
    %c0_i32 = arith.constant 0 : i32
    %c0_i32_1 = arith.constant 0 : i32
    %c0_i32_2 = arith.constant 0 : i32
    return %arg0, %1, %c0_i32, %c0_i32_1 : i32, i32, i32, i32
  }
  func.func @transform_2(%arg0: i32, %arg1: i32) -> (i32, i32, i32) {
    %c0_i32 = arith.constant 0 : i32
    %c0_i32_0 = arith.constant 0 : i32
    %c0_i32_1 = arith.constant 0 : i32
    %c0_i32_2 = arith.constant 0 : i32
    return %c0_i32, %c0_i32_0, %c0_i32_1 : i32, i32, i32
  }
  func.func @transform_3(%arg0: i32, %arg1: i32) -> (i32, i32) {
    %c0_i32 = arith.constant 0 : i32
    %c0_i32_0 = arith.constant 0 : i32
    %c0_i32_1 = arith.constant 0 : i32
    return %c0_i32, %c0_i32_0 : i32, i32
  }
  func.func @transform_4(%arg0: i32, %arg1: i32) -> (i32, i32, i32, i32, i32) {
    %c0_i32 = arith.constant 0 : i32
    %c0_i32_0 = arith.constant 0 : i32
    %c0_i32_1 = arith.constant 0 : i32
    %c0_i32_2 = arith.constant 0 : i32
    return %arg0, %c0_i32, %arg1, %c0_i32_0, %c0_i32_1 : i32, i32, i32, i32, i32
  }
}

</mosaic_0001>

<llo_original>
// kernel: tpu_custom_call.1
$region0: #{tpu_custom_call.1}
  #allocation0 [shape = 'u32[]', space=smem, size = 0x4, offset = 0x4, fixed_abs, tag = 'smem constant byte address 0x4 - core index']
  #allocation1 [shape = 'u32[72,128]{1,0:T(1,128)}', space=vmem, size = 0x9000, scoped, tag = 'internal scratch']
  %s0 = inlined_call_operand.vmem [shape: f32[2,18,18,4], index: 0, kind: input, shape index: {}]
  %s1 = inlined_call_operand.vmem [shape: f32[2,18,18,4], index: 1, kind: input, shape index: {}]
  %s2 = inlined_call_operand.vmem [shape: f32[4,16,4], index: 2, kind: input, shape index: {}]
  %s3 = inlined_call_operand.vmem [shape: f32[1,4], index: 3, kind: input, shape index: {}]
  %s4 = inlined_call_operand.vmem [shape: f32[2,4,16,16,4], index: 4, kind: output, shape index: {}]
  %s5 = sld [smem:[#allocation0]]
  $region49: #{tpu_custom_call.1} parent=0
    _
  %s7 = ssub.s32 1, %s5
  %s8 = scalar_select 0, %s7, %s5
  loop: start=0, step=1, limit=4
  $region2: #{tpu_custom_call.1} parent=0 // loop_pre_header
    _
  $region3: #{tpu_custom_call.1} parent=0 // loop_header
    %s10 = sphi 0, %s14
    %p11 = scmp.ge.s32.totalorder %s10, 4
    %s17 = sphi 0, %s29
    %s18 = sphi 0, %s25
    %s19 = sphi 0, %s17
    %s20 = sphi 0, %s18
    %s21 = sphi 0, %s19
    %s22 = sphi 0, %s20
    %s34 = sphi 0, %s36
    %s37 = sphi 0, %s34
    %s38 = sphi 0, %s37
    %s54 = sphi 0, %s38
    %s66 = sphi 0, %s68
    %s69 = sphi 0, %s66
    %s70 = sphi 0, %s69
    %s86 = sphi 0, %s70
    %s90 = sphi 0, %s90
    %s92 = sphi 0, %s90
    %s93 = sphi 0, %s92
    %s107 = sphi 0, %s93
    %s111 = sphi 0, %s111
    %s113 = sphi 0, %s111
    %s114 = sphi 0, %s113
    %s128 = sphi 0, %s114
    %s136 = sphi 0, %s138
    %s139 = sphi 0, %s136
    %s140 = sphi 0, %s139
    %s156 = sphi 0, %s140
  $region4: #{tpu_custom_call.1} parent=0 // loop_header_branch
    %13 = sbr.rel (%p11) target = $region8
  $region5: #{tpu_custom_call.1} parent=0 // loop_body
    %s15 = ssub.s32 %s10, 1
    %s16 = ssub.s32 %s10, 2
    %s23 = sadd.s32 1, %s18
    %p24 = scmp.ge.s32.totalorder %s23, 1
    %s25 = scalar_select %p24, 0, %s23
    %s26 = sadd.s32 1, %s17
    %s27 = scalar_select %p24, %s26, %s17
    %p28 = scmp.ge.s32.totalorder %s27, 2
    %s29 = scalar_select %p28, 0, %s27
    %s30 = ssub.s32 %s17, %s29
    %s31 = ssub.s32 %s18, %s25
    %s32 = sor.u32 %s30, %s31
    %p33 = scmp.eq.s32.totalorder %s32, 0
    %s35 = sadd.s32 %s34, 1
    %s36 = scalar_select %p33, %s34, %s35
    %p39 = pneg %p33
    %p40 = scmp.eq.s32.totalorder %s10, 1
    %p41 = por %p39, %p40
    %p42 = scmp.ne.s32.totalorder %s34, %s37
    %p43 = scmp.eq.s32.totalorder %s10, 0
    %p44 = por %p42, %p43
    %p45 = scmp.ne.s32.totalorder %s34, %s37
    %p46 = scmp.eq.s32.totalorder %s15, 1
    %p47 = por %p45, %p46
    %p48 = scmp.ne.s32.totalorder %s37, %s38
    %p49 = scmp.eq.s32.totalorder %s15, 0
    %p50 = por %p48, %p49
    %p51 = scmp.ne.s32.totalorder %s37, %s38
    %p52 = scmp.eq.s32.totalorder %s16, 1
    %p53 = por %p51, %p52
    %p55 = scmp.ne.s32.totalorder %s38, %s54
    %p56 = scmp.eq.s32.totalorder %s16, 0
    %p57 = por %p55, %p56
    %s58 = smul.u32 %s18, 8
    %s59 = sadd.s32 %s58, 8
    %s60 = smul.u32 %s25, 8
    %s61 = sadd.s32 %s60, 8
    %s62 = ssub.s32 %s17, %s29
    %s63 = ssub.s32 %s59, %s61
    %s64 = sor.u32 %s62, %s63
    %p65 = scmp.eq.s32.totalorder %s64, 0
    %s67 = sadd.s32 %s66, 1
    %s68 = scalar_select %p65, %s66, %s67
    %p71 = pneg %p65
    %p72 = scmp.eq.s32.totalorder %s10, 1
    %p73 = por %p71, %p72
    %p74 = scmp.ne.s32.totalorder %s66, %s69
    %p75 = scmp.eq.s32.totalorder %s10, 0
    %p76 = por %p74, %p75
    %p77 = scmp.ne.s32.totalorder %s66, %s69
    %p78 = scmp.eq.s32.totalorder %s15, 1
    %p79 = por %p77, %p78
    %p80 = scmp.ne.s32.totalorder %s69, %s70
    %p81 = scmp.eq.s32.totalorder %s15, 0
    %p82 = por %p80, %p81
    %p83 = scmp.ne.s32.totalorder %s69, %s70
    %p84 = scmp.eq.s32.totalorder %s16, 1
    %p85 = por %p83, %p84
    %p87 = scmp.ne.s32.totalorder %s70, %s86
    %p88 = scmp.eq.s32.totalorder %s16, 0
    %p89 = por %p87, %p88
    %s91 = sadd.s32 %s90, 1
    %p94 = scmp.eq.s32.totalorder %s10, 1
    %p95 = scmp.ne.s32.totalorder %s90, %s92
    %p96 = scmp.eq.s32.totalorder %s10, 0
    %p97 = por %p95, %p96
    %p98 = scmp.ne.s32.totalorder %s90, %s92
    %p99 = scmp.eq.s32.totalorder %s15, 1
    %p100 = por %p98, %p99
    %p101 = scmp.ne.s32.totalorder %s92, %s93
    %p102 = scmp.eq.s32.totalorder %s15, 0
    %p103 = por %p101, %p102
    %p104 = scmp.ne.s32.totalorder %s92, %s93
    %p105 = scmp.eq.s32.totalorder %s16, 1
    %p106 = por %p104, %p105
    %p108 = scmp.ne.s32.totalorder %s93, %s107
    %p109 = scmp.eq.s32.totalorder %s16, 0
    %p110 = por %p108, %p109
    %s112 = sadd.s32 %s111, 1
    %p115 = scmp.eq.s32.totalorder %s10, 1
    %p116 = scmp.ne.s32.totalorder %s111, %s113
    %p117 = scmp.eq.s32.totalorder %s10, 0
    %p118 = por %p116, %p117
    %p119 = scmp.ne.s32.totalorder %s111, %s113
    %p120 = scmp.eq.s32.totalorder %s15, 1
    %p121 = por %p119, %p120
    %p122 = scmp.ne.s32.totalorder %s113, %s114
    %p123 = scmp.eq.s32.totalorder %s15, 0
    %p124 = por %p122, %p123
    %p125 = scmp.ne.s32.totalorder %s113, %s114
    %p126 = scmp.eq.s32.totalorder %s16, 1
    %p127 = por %p125, %p126
    %p129 = scmp.ne.s32.totalorder %s114, %s128
    %p130 = scmp.eq.s32.totalorder %s16, 0
    %p131 = por %p129, %p130
    %s132 = ssub.s32 %s17, %s29
    %s133 = ssub.s32 %s18, %s25
    %s134 = sor.u32 %s132, %s133
    %p135 = scmp.eq.s32.totalorder %s134, 0
    %s137 = sadd.s32 %s136, 1
    %s138 = scalar_select %p135, %s136, %s137
    %p141 = pneg %p135
    %p142 = scmp.eq.s32.totalorder %s10, 1
    %p143 = por %p141, %p142
    %p144 = scmp.ne.s32.totalorder %s136, %s139
    %p145 = scmp.eq.s32.totalorder %s10, 0
    %p146 = por %p144, %p145
    %p147 = scmp.ne.s32.totalorder %s136, %s139
    %p148 = scmp.eq.s32.totalorder %s15, 1
    %p149 = por %p147, %p148
    %p150 = scmp.ne.s32.totalorder %s139, %s140
    %p151 = scmp.eq.s32.totalorder %s15, 0
    %p152 = por %p150, %p151
    %p153 = scmp.ne.s32.totalorder %s139, %s140
    %p154 = scmp.eq.s32.totalorder %s16, 1
    %p155 = por %p153, %p154
    %p157 = scmp.ne.s32.totalorder %s140, %s156
    %p158 = scmp.eq.s32.totalorder %s16, 0
    %p159 = por %p157, %p158
    %p160 = scmp.le.s32.totalorder 1, %s10
    %p161 = scmp.lt.s32.totalorder %s10, 3
    %p162 = pnand %p160, %p161
    %p163 = pneg %p162
    // Predicated region
    $region9: #{tpu_custom_call.1} parent=5 // pred_check
      _
    $region10: #{tpu_custom_call.1} parent=5 // pred_check_branch
      %165 = sbr.rel (%p162) target = $region12
    $region11: #{tpu_custom_call.1} parent=5 // pred_region
      %s166 = ssub.s32 %s10, 1
      // Predicated region
      $region13: #{tpu_custom_call.1} parent=11 // pred_check
        %p167 = pneg %p103
      $region14: #{tpu_custom_call.1} parent=11 // pred_check_branch
        %169 = sbr.rel (%p167) target = $region16
      $region15: #{tpu_custom_call.1} parent=11 // pred_region
        _
      $region16: #{tpu_custom_call.1} parent=11 // pred_fallthru
        _
      // Predicated region
      $region17: #{tpu_custom_call.1} parent=11 // pred_check
        %p170 = pneg %p124
      $region18: #{tpu_custom_call.1} parent=11 // pred_check_branch
        %172 = sbr.rel (%p170) target = $region20
      $region19: #{tpu_custom_call.1} parent=11 // pred_region
        _
      $region20: #{tpu_custom_call.1} parent=11 // pred_fallthru
        _
    $region12: #{tpu_custom_call.1} parent=5 // pred_fallthru
      _
    %p173 = scmp.lt.s32.totalorder %s10, 2
    // Predicated region
    $region21: #{tpu_custom_call.1} parent=5 // pred_check
      %p174 = pneg %p173
    $region22: #{tpu_custom_call.1} parent=5 // pred_check_branch
      %176 = sbr.rel (%p174) target = $region24
    $region23: #{tpu_custom_call.1} parent=5 // pred_region
      // Predicated region
      $region25: #{tpu_custom_call.1} parent=23 // pred_check
        %p177 = pneg %p44
      $region26: #{tpu_custom_call.1} parent=23 // pred_check_branch
        %179 = sbr.rel (%p177) target = $region28
      $region27: #{tpu_custom_call.1} parent=23 // pred_region
        %s180 = smul.u32 16, %s18
        %s181 = ssub.s32 18, %s180
        %p182 = scmp.lt.s32.totalorder %s181, 16
        %s183 = scalar_select %p182, %s181, 16
        %s184 = smul.u32 8, %s183
        %s185 = smul.u32 %s184, 3
        %p186 = scmp.lt.s32.totalorder %s17, 1
        %s187 = scalar_select %p186, %s17, 1
        %p188 = scmp.lt.s32.totalorder %s180, 17
        %s189 = scalar_select %p188, %s180, 17
        %s190 = smul.addr %s189, 3
        %s191 = smul.addr %s187, 54
        %s192 = sadd.s32 %s190, %s191
        %s193 = smul.addr %s192, 8
        %s194 = scalar_lea.vmem %s0, %s193
        %s195 = smul.u32 16, %s18
        %s196 = ssub.s32 18, %s195
        %p197 = scmp.lt.s32.totalorder %s196, 16
        %s198 = scalar_select %p197, %s196, 16
        %s199 = smul.u32 8, %s198
        %s200 = smul.u32 %s199, 3
      $region28: #{tpu_custom_call.1} parent=23 // pred_fallthru
        _
      // Predicated region
      $region29: #{tpu_custom_call.1} parent=23 // pred_check
        %p201 = pneg %p76
      $region30: #{tpu_custom_call.1} parent=23 // pred_check_branch
        %203 = sbr.rel (%p201) target = $region32
      $region31: #{tpu_custom_call.1} parent=23 // pred_region
        %s204 = smul.u32 %s18, 8
        %s205 = sadd.s32 %s204, 8
        %s206 = smul.u32 2, %s205
        %p207 = scmp.lt.s32.totalorder %s17, 1
        %s208 = scalar_select %p207, %s17, 1
        %p209 = scmp.lt.s32.totalorder %s206, 17
        %s210 = scalar_select %p209, %s206, 17
        %s211 = smul.addr %s210, 3
        %s212 = smul.addr %s208, 54
        %s213 = sadd.s32 %s211, %s212
        %s214 = smul.addr %s213, 8
        %s215 = scalar_lea.vmem %s1, %s214
        %s216 = smul.u32 %s18, 8
        %s217 = sadd.s32 %s216, 8
        %s218 = smul.u32 2, %s217
      $region32: #{tpu_custom_call.1} parent=23 // pred_fallthru
        _
    $region24: #{tpu_custom_call.1} parent=5 // pred_fallthru
      _
    %p219 = scmp.le.s32.totalorder 1, %s10
    %p220 = scmp.lt.s32.totalorder %s10, 3
    %p221 = pnand %p219, %p220
    %p222 = pneg %p221
    // Predicated region
    $region33: #{tpu_custom_call.1} parent=5 // pred_check
      _
    $region34: #{tpu_custom_call.1} parent=5 // pred_check_branch
      %224 = sbr.rel (%p221) target = $region36
    $region35: #{tpu_custom_call.1} parent=5 // pred_region
      %s225 = ssub.s32 %s10, 1
      %s226 = smul.u32 16, %s20
      %s227 = ssub.s32 18, %s226
      %p228 = scmp.lt.s32.totalorder %s227, 16
      %s229 = scalar_select %p228, %s227, 16
      %s230 = smul.u32 8, %s229
      %s231 = smul.u32 %s230, 3
      %p232 = scmp.lt.s32.totalorder %s19, 1
      %s233 = scalar_select %p232, %s19, 1
      %p234 = scmp.lt.s32.totalorder %s226, 17
      %s235 = scalar_select %p234, %s226, 17
      %s236 = smul.addr %s235, 3
      %s237 = smul.addr %s233, 54
      %s238 = sadd.s32 %s236, %s237
      %s239 = smul.addr %s238, 8
      %s240 = scalar_lea.vmem %s0, %s239
      %p241 = pneg %p50
      %p242 = pneg %p47
      %s243 = smul.u32 %s20, 8
      %s244 = sadd.s32 %s243, 8
      %s245 = smul.u32 2, %s244
      %p246 = scmp.lt.s32.totalorder %s19, 1
      %s247 = scalar_select %p246, %s19, 1
      %p248 = scmp.lt.s32.totalorder %s245, 17
      %s249 = scalar_select %p248, %s245, 17
      %s250 = smul.addr %s249, 3
      %s251 = smul.addr %s247, 54
      %s252 = sadd.s32 %s250, %s251
      %s253 = smul.addr %s252, 8
      %s254 = scalar_lea.vmem %s1, %s253
      %p255 = pneg %p82
      %p256 = pneg %p79
      %p257 = pneg %p103
      %p258 = pneg %p100
      %p259 = pneg %p124
      %p260 = pneg %p121
      %p261 = pneg %p152
      %p262 = pneg %p149
      %s263 = smul.u32 16, %s20
      %p264 = scmp.lt.s32.totalorder %s19, 1
      %s265 = scalar_select %p264, %s19, 1
      %p266 = scmp.lt.s32.totalorder %s263, 15
      %s267 = scalar_select %p266, %s263, 15
      %s268 = smul.addr %s267, 2
      %s269 = smul.addr %s265, 128
      %s270 = sadd.s32 %s268, %s269
      %s271 = smul.addr %s270, 8
      %s272 = scalar_lea.vmem %s4, %s271
      %s273 = smul.u32 16, %s20
      %s274 = ssub.s32 18, %s273
      %p275 = scmp.lt.s32.totalorder %s274, 16
      %s276 = scalar_select %p275, %s274, 16
      %s277 = smul.u32 8, %s276
      %s278 = smul.u32 %s277, 3
      %p279 = scmp.lt.s32.totalorder %s19, 1
      %s280 = scalar_select %p279, %s19, 1
      %p281 = scmp.lt.s32.totalorder %s273, 17
      %s282 = scalar_select %p281, %s273, 17
      %s283 = smul.addr %s282, 3
      %s284 = smul.addr %s280, 54
      %s285 = sadd.s32 %s283, %s284
      %s286 = smul.addr %s285, 8
      %s287 = scalar_lea.vmem %s0, %s286
      %s288 = smul.u32 16, %s20
      %s289 = ssub.s32 18, %s288
      %p290 = scmp.lt.s32.totalorder %s289, 16
      %s291 = scalar_select %p290, %s289, 16
      %s292 = smul.u32 8, %s291
      %s293 = smul.u32 %s292, 3
      %s294 = smul.u32 %s20, 8
      %s295 = sadd.s32 %s294, 8
      %s296 = smul.u32 2, %s295
      %p297 = scmp.lt.s32.totalorder %s19, 1
      %s298 = scalar_select %p297, %s19, 1
      %p299 = scmp.lt.s32.totalorder %s296, 17
      %s300 = scalar_select %p299, %s296, 17
      %s301 = smul.addr %s300, 3
      %s302 = smul.addr %s298, 54
      %s303 = sadd.s32 %s301, %s302
      %s304 = smul.addr %s303, 8
      %s305 = scalar_lea.vmem %s1, %s304
      %s306 = smul.u32 %s20, 8
      %s307 = sadd.s32 %s306, 8
      %s308 = smul.u32 2, %s307
      %s309 = smul.u32 16, %s20
      %p310 = scmp.lt.s32.totalorder %s19, 1
      %s311 = scalar_select %p310, %s19, 1
      %p312 = scmp.lt.s32.totalorder %s309, 15
      %s313 = scalar_select %p312, %s309, 15
      %s314 = smul.addr %s313, 2
      %s315 = smul.addr %s311, 128
      %s316 = sadd.s32 %s314, %s315
      %s317 = smul.addr %s316, 8
      %s318 = scalar_lea.vmem %s4, %s317
      %s319 = smul.u32 16, %s20
      %v320 = vld [vmem:[%s287] sm:$0xff]
      %v321 = vld [vmem:[%s287 + $0x8] sm:$0xff]
      %v322 = vld [vmem:[%s287 + $0x10] sm:$0x3]
      %v323 = vld [vmem:[%s287 + $0x18] sm:$0xff]
      %v324 = vld [vmem:[%s287 + $0x20] sm:$0xff]
      %v325 = vld [vmem:[%s287 + $0x28] sm:$0x3]
      %v326 = vld [vmem:[%s287 + $0x30] sm:$0xff]
      %v327 = vld [vmem:[%s287 + $0x38] sm:$0xff]
      %v328 = vld [vmem:[%s287 + $0x40] sm:$0x3]
      %v329 = vld [vmem:[%s287 + $0x48] sm:$0xff]
      %v330 = vld [vmem:[%s287 + $0x50] sm:$0xff]
      %v331 = vld [vmem:[%s287 + $0x58] sm:$0x3]
      %v332 = vld [vmem:[%s287 + $0x60] sm:$0xff]
      %v333 = vld [vmem:[%s287 + $0x68] sm:$0xff]
      %v334 = vld [vmem:[%s287 + $0x70] sm:$0x3]
      %v335 = vld [vmem:[%s287 + $0x78] sm:$0xff]
      %v336 = vld [vmem:[%s287 + $0x80] sm:$0xff]
      %v337 = vld [vmem:[%s287 + $0x88] sm:$0x3]
      %v338 = vld [vmem:[%s287 + $0x90] sm:$0xff]
      %v339 = vld [vmem:[%s287 + $0x98] sm:$0xff]
      %v340 = vld [vmem:[%s287 + $0xa0] sm:$0x3]
      %v341 = vld [vmem:[%s287 + $0xa8] sm:$0xff]
      %v342 = vld [vmem:[%s287 + $0xb0] sm:$0xff]
      %v343 = vld [vmem:[%s287 + $0xb8] sm:$0x3]
      %v344 = vld [vmem:[%s287 + $0xc0] sm:$0xff]
      %v345 = vld [vmem:[%s287 + $0xc8] sm:$0xff]
      %v346 = vld [vmem:[%s287 + $0xd0] sm:$0x3]
      %v347 = vld [vmem:[%s287 + $0xd8] sm:$0xff]
      %v348 = vld [vmem:[%s287 + $0xe0] sm:$0xff]
      %v349 = vld [vmem:[%s287 + $0xe8] sm:$0x3]
      %v350 = vld [vmem:[%s287 + $0xf0] sm:$0xff]
      %v351 = vld [vmem:[%s287 + $0xf8] sm:$0xff]
      %v352 = vld [vmem:[%s287 + $0x100] sm:$0x3]
      %v353 = vld [vmem:[%s287 + $0x108] sm:$0xff]
      %v354 = vld [vmem:[%s287 + $0x110] sm:$0xff]
      %v355 = vld [vmem:[%s287 + $0x118] sm:$0x3]
      %v356 = vld [vmem:[%s287 + $0x120] sm:$0xff]
      %v357 = vld [vmem:[%s287 + $0x128] sm:$0xff]
      %v358 = vld [vmem:[%s287 + $0x130] sm:$0x3]
      %v359 = vld [vmem:[%s287 + $0x138] sm:$0xff]
      %v360 = vld [vmem:[%s287 + $0x140] sm:$0xff]
      %v361 = vld [vmem:[%s287 + $0x148] sm:$0x3]
      %v362 = vld [vmem:[%s287 + $0x150] sm:$0xff]
      %v363 = vld [vmem:[%s287 + $0x158] sm:$0xff]
      %v364 = vld [vmem:[%s287 + $0x160] sm:$0x3]
      %v365 = vld [vmem:[%s287 + $0x168] sm:$0xff]
      %v366 = vld [vmem:[%s287 + $0x170] sm:$0xff]
      %v367 = vld [vmem:[%s287 + $0x178] sm:$0x3]
      %v368 = vld [vmem:[%s305] sm:$0xff]
      %v369 = vld [vmem:[%s305 + $0x8] sm:$0xff]
      %v370 = vld [vmem:[%s305 + $0x10] sm:$0x3]
      %v371 = vld [vmem:[%s305 + $0x18] sm:$0xff]
      %v372 = vld [vmem:[%s305 + $0x20] sm:$0xff]
      %v373 = vld [vmem:[%s305 + $0x28] sm:$0x3]
      %v374 = vld [vmem:[%s3] sm:$0x1]
      %vm426 = vcmask 1046528
      %v427 = vrot.slane %v320, 1
      %v428 = vrot.slane %v321, 1
      %v429 = vsel %vm426, %v427, %v428
      %v430 = vrot.slane %v322, 1
      %v431 = vsel %vm426, %v428, %v430
      %v432 = vrot.slane %v323, 1
      %v433 = vrot.slane %v324, 1
      %v434 = vsel %vm426, %v432, %v433
      %v435 = vrot.slane %v325, 1
      %v436 = vsel %vm426, %v433, %v435
      %v437 = vrot.slane %v326, 1
      %v438 = vrot.slane %v327, 1
      %v439 = vsel %vm426, %v437, %v438
      %v440 = vrot.slane %v328, 1
      %v441 = vsel %vm426, %v438, %v440
      %v442 = vrot.slane %v329, 1
      %v443 = vrot.slane %v330, 1
      %v444 = vsel %vm426, %v442, %v443
      %v445 = vrot.slane %v331, 1
      %v446 = vsel %vm426, %v443, %v445
      %v447 = vrot.slane %v332, 1
      %v448 = vrot.slane %v333, 1
      %v449 = vsel %vm426, %v447, %v448
      %v450 = vrot.slane %v334, 1
      %v451 = vsel %vm426, %v448, %v450
      %v452 = vrot.slane %v335, 1
      %v453 = vrot.slane %v336, 1
      %v454 = vsel %vm426, %v452, %v453
      %v455 = vrot.slane %v337, 1
      %v456 = vsel %vm426, %v453, %v455
      %v457 = vrot.slane %v338, 1
      %v458 = vrot.slane %v339, 1
      %v459 = vsel %vm426, %v457, %v458
      %v460 = vrot.slane %v340, 1
      %v461 = vsel %vm426, %v458, %v460
      %v462 = vrot.slane %v341, 1
      %v463 = vrot.slane %v342, 1
      %v464 = vsel %vm426, %v462, %v463
      %v465 = vrot.slane %v343, 1
      %v466 = vsel %vm426, %v463, %v465
      %v467 = vrot.slane %v344, 1
      %v468 = vrot.slane %v345, 1
      %v469 = vsel %vm426, %v467, %v468
      %v470 = vrot.slane %v346, 1
      %v471 = vsel %vm426, %v468, %v470
      %v472 = vrot.slane %v347, 1
      %v473 = vrot.slane %v348, 1
      %v474 = vsel %vm426, %v472, %v473
      %v475 = vrot.slane %v349, 1
      %v476 = vsel %vm426, %v473, %v475
      %v477 = vrot.slane %v350, 1
      %v478 = vrot.slane %v351, 1
      %v479 = vsel %vm426, %v477, %v478
      %v480 = vrot.slane %v352, 1
      %v481 = vsel %vm426, %v478, %v480
      %v482 = vrot.slane %v353, 1
      %v483 = vrot.slane %v354, 1
      %v484 = vsel %vm426, %v482, %v483
      %v485 = vrot.slane %v355, 1
      %v486 = vsel %vm426, %v483, %v485
      %v487 = vrot.slane %v356, 1
      %v488 = vrot.slane %v357, 1
      %v489 = vsel %vm426, %v487, %v488
      %v490 = vrot.slane %v358, 1
      %v491 = vsel %vm426, %v488, %v490
      %v492 = vrot.slane %v359, 1
      %v493 = vrot.slane %v360, 1
      %v494 = vsel %vm426, %v492, %v493
      %v495 = vrot.slane %v361, 1
      %v496 = vsel %vm426, %v493, %v495
      %v497 = vrot.slane %v362, 1
      %v498 = vrot.slane %v363, 1
      %v499 = vsel %vm426, %v497, %v498
      %v500 = vrot.slane %v364, 1
      %v501 = vsel %vm426, %v498, %v500
      %v502 = vrot.slane %v365, 1
      %v503 = vrot.slane %v366, 1
      %v504 = vsel %vm426, %v502, %v503
      %v505 = vrot.slane %v367, 1
      %v506 = vsel %vm426, %v503, %v505
      %v507 = vrot.slane %v368, 1
      %v508 = vrot.slane %v369, 1
      %v509 = vsel %vm426, %v507, %v508
      %v510 = vrot.slane %v370, 1
      %v511 = vsel %vm426, %v508, %v510
      %512 = vrot.lane.b32.xlu0 %v429, 4
      %v513 = vpop.permute.xlu0 %512
      %514 = vrot.lane.b32.xlu0 %v431, 4
      %v515 = vpop.permute.xlu0 %514
      %516 = vrot.lane.b32.xlu0 %v434, 4
      %v517 = vpop.permute.xlu0 %516
      %518 = vrot.lane.b32.xlu0 %v436, 4
      %v519 = vpop.permute.xlu0 %518
      %520 = vrot.lane.b32.xlu0 %v439, 4
      %v521 = vpop.permute.xlu0 %520
      %522 = vrot.lane.b32.xlu0 %v441, 4
      %v523 = vpop.permute.xlu0 %522
      %524 = vrot.lane.b32.xlu0 %v444, 4
      %v525 = vpop.permute.xlu0 %524
      %526 = vrot.lane.b32.xlu0 %v446, 4
      %v527 = vpop.permute.xlu0 %526
      %528 = vrot.lane.b32.xlu0 %v449, 4
      %v529 = vpop.permute.xlu0 %528
      %530 = vrot.lane.b32.xlu0 %v451, 4
      %v531 = vpop.permute.xlu0 %530
      %532 = vrot.lane.b32.xlu0 %v454, 4
      %v533 = vpop.permute.xlu0 %532
      %534 = vrot.lane.b32.xlu0 %v456, 4
      %v535 = vpop.permute.xlu0 %534
      %536 = vrot.lane.b32.xlu0 %v459, 4
      %v537 = vpop.permute.xlu0 %536
      %538 = vrot.lane.b32.xlu0 %v461, 4
      %v539 = vpop.permute.xlu0 %538
      %540 = vrot.lane.b32.xlu0 %v464, 4
      %v541 = vpop.permute.xlu0 %540
      %542 = vrot.lane.b32.xlu0 %v466, 4
      %v543 = vpop.permute.xlu0 %542
      %544 = vrot.lane.b32.xlu0 %v469, 4
      %v545 = vpop.permute.xlu0 %544
      %546 = vrot.lane.b32.xlu0 %v471, 4
      %v547 = vpop.permute.xlu0 %546
      %548 = vrot.lane.b32.xlu0 %v474, 4
      %v549 = vpop.permute.xlu0 %548
      %550 = vrot.lane.b32.xlu0 %v476, 4
      %v551 = vpop.permute.xlu0 %550
      %552 = vrot.lane.b32.xlu0 %v479, 4
      %v553 = vpop.permute.xlu0 %552
      %554 = vrot.lane.b32.xlu0 %v481, 4
      %v555 = vpop.permute.xlu0 %554
      %556 = vrot.lane.b32.xlu0 %v484, 4
      %v557 = vpop.permute.xlu0 %556
      %558 = vrot.lane.b32.xlu0 %v486, 4
      %v559 = vpop.permute.xlu0 %558
      %560 = vrot.lane.b32.xlu0 %v489, 4
      %v561 = vpop.permute.xlu0 %560
      %562 = vrot.lane.b32.xlu0 %v491, 4
      %v563 = vpop.permute.xlu0 %562
      %564 = vrot.lane.b32.xlu0 %v494, 4
      %v565 = vpop.permute.xlu0 %564
      %566 = vrot.lane.b32.xlu0 %v496, 4
      %v567 = vpop.permute.xlu0 %566
      %568 = vrot.lane.b32.xlu0 %v499, 4
      %v569 = vpop.permute.xlu0 %568
      %570 = vrot.lane.b32.xlu0 %v501, 4
      %v571 = vpop.permute.xlu0 %570
      %572 = vrot.lane.b32.xlu0 %v504, 4
      %v573 = vpop.permute.xlu0 %572
      %574 = vrot.lane.b32.xlu0 %v506, 4
      %v575 = vpop.permute.xlu0 %574
      %576 = vrot.lane.b32.xlu0 %v509, 4
      %v577 = vpop.permute.xlu0 %576
      %578 = vrot.lane.b32.xlu0 %v511, 4
      %v579 = vpop.permute.xlu0 %578
      %616 = vrot.lane.b32.xlu0 %v323, 8
      %v617 = vpop.permute.xlu0 %616
      %618 = vrot.lane.b32.xlu0 %v324, 8
      %v619 = vpop.permute.xlu0 %618
      %620 = vrot.lane.b32.xlu0 %v326, 8
      %v621 = vpop.permute.xlu0 %620
      %622 = vrot.lane.b32.xlu0 %v327, 8
      %v623 = vpop.permute.xlu0 %622
      %624 = vrot.lane.b32.xlu0 %v329, 8
      %v625 = vpop.permute.xlu0 %624
      %626 = vrot.lane.b32.xlu0 %v330, 8
      %v627 = vpop.permute.xlu0 %626
      %628 = vrot.lane.b32.xlu0 %v332, 8
      %v629 = vpop.permute.xlu0 %628
      %630 = vrot.lane.b32.xlu0 %v333, 8
      %v631 = vpop.permute.xlu0 %630
      %632 = vrot.lane.b32.xlu0 %v335, 8
      %v633 = vpop.permute.xlu0 %632
      %634 = vrot.lane.b32.xlu0 %v336, 8
      %v635 = vpop.permute.xlu0 %634
      %636 = vrot.lane.b32.xlu0 %v338, 8
      %v637 = vpop.permute.xlu0 %636
      %638 = vrot.lane.b32.xlu0 %v339, 8
      %v639 = vpop.permute.xlu0 %638
      %640 = vrot.lane.b32.xlu0 %v341, 8
      %v641 = vpop.permute.xlu0 %640
      %642 = vrot.lane.b32.xlu0 %v342, 8
      %v643 = vpop.permute.xlu0 %642
      %644 = vrot.lane.b32.xlu0 %v344, 8
      %v645 = vpop.permute.xlu0 %644
      %646 = vrot.lane.b32.xlu0 %v345, 8
      %v647 = vpop.permute.xlu0 %646
      %648 = vrot.lane.b32.xlu0 %v347, 8
      %v649 = vpop.permute.xlu0 %648
      %650 = vrot.lane.b32.xlu0 %v348, 8
      %v651 = vpop.permute.xlu0 %650
      %652 = vrot.lane.b32.xlu0 %v350, 8
      %v653 = vpop.permute.xlu0 %652
      %654 = vrot.lane.b32.xlu0 %v351, 8
      %v655 = vpop.permute.xlu0 %654
      %656 = vrot.lane.b32.xlu0 %v353, 8
      %v657 = vpop.permute.xlu0 %656
      %658 = vrot.lane.b32.xlu0 %v354, 8
      %v659 = vpop.permute.xlu0 %658
      %660 = vrot.lane.b32.xlu0 %v356, 8
      %v661 = vpop.permute.xlu0 %660
      %662 = vrot.lane.b32.xlu0 %v357, 8
      %v663 = vpop.permute.xlu0 %662
      %664 = vrot.lane.b32.xlu0 %v359, 8
      %v665 = vpop.permute.xlu0 %664
      %666 = vrot.lane.b32.xlu0 %v360, 8
      %v667 = vpop.permute.xlu0 %666
      %668 = vrot.lane.b32.xlu0 %v362, 8
      %v669 = vpop.permute.xlu0 %668
      %670 = vrot.lane.b32.xlu0 %v363, 8
      %v671 = vpop.permute.xlu0 %670
      %672 = vrot.lane.b32.xlu0 %v365, 8
      %v673 = vpop.permute.xlu0 %672
      %674 = vrot.lane.b32.xlu0 %v366, 8
      %v675 = vpop.permute.xlu0 %674
      %676 = vrot.lane.b32.xlu0 %v368, 8
      %v677 = vpop.permute.xlu0 %676
      %678 = vrot.lane.b32.xlu0 %v369, 8
      %v679 = vpop.permute.xlu0 %678
      %680 = vrot.lane.b32.xlu0 %v371, 8
      %v681 = vpop.permute.xlu0 %680
      %682 = vrot.lane.b32.xlu0 %v372, 8
      %v683 = vpop.permute.xlu0 %682
      %v719 = vrot.slane %v371, 1
      %v720 = vrot.slane %v372, 1
      %v721 = vsel %vm426, %v719, %v720
      %v722 = vrot.slane %v373, 1
      %v723 = vsel %vm426, %v720, %v722
      %724 = vrot.lane.b32.xlu0 %v434, 12
      %v725 = vpop.permute.xlu0 %724
      %726 = vrot.lane.b32.xlu0 %v436, 12
      %v727 = vpop.permute.xlu0 %726
      %728 = vrot.lane.b32.xlu0 %v439, 12
      %v729 = vpop.permute.xlu0 %728
      %730 = vrot.lane.b32.xlu0 %v441, 12
      %v731 = vpop.permute.xlu0 %730
      %732 = vrot.lane.b32.xlu0 %v444, 12
      %v733 = vpop.permute.xlu0 %732
      %734 = vrot.lane.b32.xlu0 %v446, 12
      %v735 = vpop.permute.xlu0 %734
      %736 = vrot.lane.b32.xlu0 %v449, 12
      %v737 = vpop.permute.xlu0 %736
      %738 = vrot.lane.b32.xlu0 %v451, 12
      %v739 = vpop.permute.xlu0 %738
      %740 = vrot.lane.b32.xlu0 %v454, 12
      %v741 = vpop.permute.xlu0 %740
      %742 = vrot.lane.b32.xlu0 %v456, 12
      %v743 = vpop.permute.xlu0 %742
      %744 = vrot.lane.b32.xlu0 %v459, 12
      %v745 = vpop.permute.xlu0 %744
      %746 = vrot.lane.b32.xlu0 %v461, 12
      %v747 = vpop.permute.xlu0 %746
      %748 = vrot.lane.b32.xlu0 %v464, 12
      %v749 = vpop.permute.xlu0 %748
      %750 = vrot.lane.b32.xlu0 %v466, 12
      %v751 = vpop.permute.xlu0 %750
      %752 = vrot.lane.b32.xlu0 %v469, 12
      %v753 = vpop.permute.xlu0 %752
      %754 = vrot.lane.b32.xlu0 %v471, 12
      %v755 = vpop.permute.xlu0 %754
      %756 = vrot.lane.b32.xlu0 %v474, 12
      %v757 = vpop.permute.xlu0 %756
      %758 = vrot.lane.b32.xlu0 %v476, 12
      %v759 = vpop.permute.xlu0 %758
      %760 = vrot.lane.b32.xlu0 %v479, 12
      %v761 = vpop.permute.xlu0 %760
      %762 = vrot.lane.b32.xlu0 %v481, 12
      %v763 = vpop.permute.xlu0 %762
      %764 = vrot.lane.b32.xlu0 %v484, 12
      %v765 = vpop.permute.xlu0 %764
      %766 = vrot.lane.b32.xlu0 %v486, 12
      %v767 = vpop.permute.xlu0 %766
      %768 = vrot.lane.b32.xlu0 %v489, 12
      %v769 = vpop.permute.xlu0 %768
      %770 = vrot.lane.b32.xlu0 %v491, 12
      %v771 = vpop.permute.xlu0 %770
      %772 = vrot.lane.b32.xlu0 %v494, 12
      %v773 = vpop.permute.xlu0 %772
      %774 = vrot.lane.b32.xlu0 %v496, 12
      %v775 = vpop.permute.xlu0 %774
      %776 = vrot.lane.b32.xlu0 %v499, 12
      %v777 = vpop.permute.xlu0 %776
      %778 = vrot.lane.b32.xlu0 %v501, 12
      %v779 = vpop.permute.xlu0 %778
      %780 = vrot.lane.b32.xlu0 %v504, 12
      %v781 = vpop.permute.xlu0 %780
      %782 = vrot.lane.b32.xlu0 %v506, 12
      %v783 = vpop.permute.xlu0 %782
      %784 = vrot.lane.b32.xlu0 %v509, 12
      %v785 = vpop.permute.xlu0 %784
      %786 = vrot.lane.b32.xlu0 %v511, 12
      %v787 = vpop.permute.xlu0 %786
      %788 = vrot.lane.b32.xlu0 %v721, 12
      %v789 = vpop.permute.xlu0 %788
      %790 = vrot.lane.b32.xlu0 %v723, 12
      %v791 = vpop.permute.xlu0 %790
      %vm826 = vcmask 31744
      %v827 = vsel %vm826, %v320, %v513
      %v828 = vsel %vm826, %v321, %v515
      %v829 = vsel %vm826, %v323, %v517
      %v830 = vsel %vm826, %v324, %v519
      %v831 = vsel %vm826, %v326, %v521
      %v832 = vsel %vm826, %v327, %v523
      %v833 = vsel %vm826, %v329, %v525
      %v834 = vsel %vm826, %v330, %v527
      %v835 = vsel %vm826, %v332, %v529
      %v836 = vsel %vm826, %v333, %v531
      %v837 = vsel %vm826, %v335, %v533
      %v838 = vsel %vm826, %v336, %v535
      %v839 = vsel %vm826, %v338, %v537
      %v840 = vsel %vm826, %v339, %v539
      %v841 = vsel %vm826, %v341, %v541
      %v842 = vsel %vm826, %v342, %v543
      %v843 = vsel %vm826, %v344, %v545
      %v844 = vsel %vm826, %v345, %v547
      %v845 = vsel %vm826, %v347, %v549
      %v846 = vsel %vm826, %v348, %v551
      %v847 = vsel %vm826, %v350, %v553
      %v848 = vsel %vm826, %v351, %v555
      %v849 = vsel %vm826, %v353, %v557
      %v850 = vsel %vm826, %v354, %v559
      %v851 = vsel %vm826, %v356, %v561
      %v852 = vsel %vm826, %v357, %v563
      %v853 = vsel %vm826, %v359, %v565
      %v854 = vsel %vm826, %v360, %v567
      %v855 = vsel %vm826, %v362, %v569
      %v856 = vsel %vm826, %v363, %v571
      %v857 = vsel %vm826, %v365, %v573
      %v858 = vsel %vm826, %v366, %v575
      %v859 = vsel %vm826, %v368, %v577
      %v860 = vsel %vm826, %v369, %v579
      %vm861 = vcmask 64512
      %v862 = vsel %vm861, %v827, %v617
      %v863 = vsel %vm861, %v828, %v619
      %v864 = vsel %vm861, %v829, %v621
      %v865 = vsel %vm861, %v830, %v623
      %v866 = vsel %vm861, %v831, %v625
      %v867 = vsel %vm861, %v832, %v627
      %v868 = vsel %vm861, %v833, %v629
      %v869 = vsel %vm861, %v834, %v631
      %v870 = vsel %vm861, %v835, %v633
      %v871 = vsel %vm861, %v836, %v635
      %v872 = vsel %vm861, %v837, %v637
      %v873 = vsel %vm861, %v838, %v639
      %v874 = vsel %vm861, %v839, %v641
      %v875 = vsel %vm861, %v840, %v643
      %v876 = vsel %vm861, %v841, %v645
      %v877 = vsel %vm861, %v842, %v647
      %v878 = vsel %vm861, %v843, %v649
      %v879 = vsel %vm861, %v844, %v651
      %v880 = vsel %vm861, %v845, %v653
      %v881 = vsel %vm861, %v846, %v655
      %v882 = vsel %vm861, %v847, %v657
      %v883 = vsel %vm861, %v848, %v659
      %v884 = vsel %vm861, %v849, %v661
      %v885 = vsel %vm861, %v850, %v663
      %v886 = vsel %vm861, %v851, %v665
      %v887 = vsel %vm861, %v852, %v667
      %v888 = vsel %vm861, %v853, %v669
      %v889 = vsel %vm861, %v854, %v671
      %v890 = vsel %vm861, %v855, %v673
      %v891 = vsel %vm861, %v856, %v675
      %v892 = vsel %vm861, %v857, %v677
      %v893 = vsel %vm861, %v858, %v679
      %v894 = vsel %vm861, %v859, %v681
      %v895 = vsel %vm861, %v860, %v683
      %vm896 = vcmask 97280
      %v897 = vsel %vm896, %v862, %v725
      %v898 = vsel %vm896, %v863, %v727
      %v899 = vsel %vm896, %v864, %v729
      %v900 = vsel %vm896, %v865, %v731
      %v901 = vsel %vm896, %v866, %v733
      %v902 = vsel %vm896, %v867, %v735
      %v903 = vsel %vm896, %v868, %v737
      %v904 = vsel %vm896, %v869, %v739
      %v905 = vsel %vm896, %v870, %v741
      %v906 = vsel %vm896, %v871, %v743
      %v907 = vsel %vm896, %v872, %v745
      %v908 = vsel %vm896, %v873, %v747
      %v909 = vsel %vm896, %v874, %v749
      %v910 = vsel %vm896, %v875, %v751
      %v911 = vsel %vm896, %v876, %v753
      %v912 = vsel %vm896, %v877, %v755
      %v913 = vsel %vm896, %v878, %v757
      %v914 = vsel %vm896, %v879, %v759
      %v915 = vsel %vm896, %v880, %v761
      %v916 = vsel %vm896, %v881, %v763
      %v917 = vsel %vm896, %v882, %v765
      %v918 = vsel %vm896, %v883, %v767
      %v919 = vsel %vm896, %v884, %v769
      %v920 = vsel %vm896, %v885, %v771
      %v921 = vsel %vm896, %v886, %v773
      %v922 = vsel %vm896, %v887, %v775
      %v923 = vsel %vm896, %v888, %v777
      %v924 = vsel %vm896, %v889, %v779
      %v925 = vsel %vm896, %v890, %v781
      %v926 = vsel %vm896, %v891, %v783
      %v927 = vsel %vm896, %v892, %v785
      %v928 = vsel %vm896, %v893, %v787
      %v929 = vsel %vm896, %v894, %v789
      %v930 = vsel %vm896, %v895, %v791
      %v931 = vld [vmem:[%s2] sm:$0xff]
      %v932 = vld [vmem:[%s2 + $0x8] sm:$0xff]
      %v934 = vperm.slane %v374, 0
      %vm936 = vcmask 130048
      %v938 = vsel %vm936, %v897, 0
      %v941 = vsel %vm936, %v898, 0
      %v944 = vsel %vm936, %v899, 0
      %v947 = vsel %vm936, %v900, 0
      %v950 = vsel %vm936, %v901, 0
      %v953 = vsel %vm936, %v902, 0
      %v956 = vsel %vm936, %v903, 0
      %v959 = vsel %vm936, %v904, 0
      %v962 = vsel %vm936, %v905, 0
      %v965 = vsel %vm936, %v906, 0
      %v968 = vsel %vm936, %v907, 0
      %v971 = vsel %vm936, %v908, 0
      %v974 = vsel %vm936, %v909, 0
      %v977 = vsel %vm936, %v910, 0
      %v980 = vsel %vm936, %v911, 0
      %v983 = vsel %vm936, %v912, 0
      %v986 = vsel %vm936, %v913, 0
      %v989 = vsel %vm936, %v914, 0
      %v992 = vsel %vm936, %v915, 0
      %v995 = vsel %vm936, %v916, 0
      %v998 = vsel %vm936, %v917, 0
      %v1001 = vsel %vm936, %v918, 0
      %v1004 = vsel %vm936, %v919, 0
      %v1007 = vsel %vm936, %v920, 0
      %v1010 = vsel %vm936, %v921, 0
      %v1013 = vsel %vm936, %v922, 0
      %v1016 = vsel %vm936, %v923, 0
      %v1019 = vsel %vm936, %v924, 0
      %v1022 = vsel %vm936, %v925, 0
      %v1025 = vsel %vm936, %v926, 0
      %v1028 = vsel %vm936, %v927, 0
      %v1031 = vsel %vm936, %v928, 0
      %1033 = vmatpush.msra.mxu0 0.0
      %1034 = vmatpush.msra.mxu0 0.0
      %1035 = vmatpush.msra.mxu0 0.0
      %1036 = vmatpush.msra.mxu0 0.0
      %1037 = vmatpush.msra.mxu0 0.0
      %1038 = vmatpush.msra.mxu0 0.0
      %1039 = vmatpush.msra.mxu0 0.0
      %1040 = vmatpush.msra.mxu0 0.0
      %1041 = vmatpush.msra.mxu0 0.0
      %1042 = vmatpush.msra.mxu0 0.0
      %1043 = vmatpush.msra.mxu0 0.0
      %1044 = vmatpush.msra.mxu0 0.0
      %1045 = vmatpush.msra.mxu0 0.0
      %1046 = vmatpush.msra.mxu0 0.0
      %1047 = vmatpush.msra.mxu0 %v932
      %1048 = vmatpush.msra.mxu0 %v931
      %1049 = vmatmul.f32.gmra.mxu0 %v938
      %v1050 = vpop.f32.mrf.mxu0
      %v1051 = vadd.f32 %v934, %v1050
      %1052 = vmatmul.f32.gmra.mxu0 %v941
      %v1053 = vpop.f32.mrf.mxu0
      %v1054 = vadd.f32 %v934, %v1053
      %1055 = vmatmul.f32.gmra.mxu0 %v944
      %v1056 = vpop.f32.mrf.mxu0
      %v1057 = vadd.f32 %v934, %v1056
      %1058 = vmatmul.f32.gmra.mxu0 %v947
      %v1059 = vpop.f32.mrf.mxu0
      %v1060 = vadd.f32 %v934, %v1059
      %1061 = vmatmul.f32.gmra.mxu0 %v950
      %v1062 = vpop.f32.mrf.mxu0
      %v1063 = vadd.f32 %v934, %v1062
      %1064 = vmatmul.f32.gmra.mxu0 %v953
      %v1065 = vpop.f32.mrf.mxu0
      %v1066 = vadd.f32 %v934, %v1065
      %1067 = vmatmul.f32.gmra.mxu0 %v956
      %v1068 = vpop.f32.mrf.mxu0
      %v1069 = vadd.f32 %v934, %v1068
      %1070 = vmatmul.f32.gmra.mxu0 %v959
      %v1071 = vpop.f32.mrf.mxu0
      %v1072 = vadd.f32 %v934, %v1071
      %1073 = vmatmul.f32.gmra.mxu0 %v962
      %v1074 = vpop.f32.mrf.mxu0
      %v1075 = vadd.f32 %v934, %v1074
      %1076 = vmatmul.f32.gmra.mxu0 %v965
      %v1077 = vpop.f32.mrf.mxu0
      %v1078 = vadd.f32 %v934, %v1077
      %1079 = vmatmul.f32.gmra.mxu0 %v968
      %v1080 = vpop.f32.mrf.mxu0
      %v1081 = vadd.f32 %v934, %v1080
      %1082 = vmatmul.f32.gmra.mxu0 %v971
      %v1083 = vpop.f32.mrf.mxu0
      %v1084 = vadd.f32 %v934, %v1083
      %1085 = vmatmul.f32.gmra.mxu0 %v974
      %v1086 = vpop.f32.mrf.mxu0
      %v1087 = vadd.f32 %v934, %v1086
      %1088 = vmatmul.f32.gmra.mxu0 %v977
      %v1089 = vpop.f32.mrf.mxu0
      %v1090 = vadd.f32 %v934, %v1089
      %1091 = vmatmul.f32.gmra.mxu0 %v980
      %v1092 = vpop.f32.mrf.mxu0
      %v1093 = vadd.f32 %v934, %v1092
      %1094 = vmatmul.f32.gmra.mxu0 %v983
      %v1095 = vpop.f32.mrf.mxu0
      %v1096 = vadd.f32 %v934, %v1095
      %1097 = vmatmul.f32.gmra.mxu0 %v986
      %v1098 = vpop.f32.mrf.mxu0
      %v1099 = vadd.f32 %v934, %v1098
      %1100 = vmatmul.f32.gmra.mxu0 %v989
      %v1101 = vpop.f32.mrf.mxu0
      %v1102 = vadd.f32 %v934, %v1101
      %1103 = vmatmul.f32.gmra.mxu0 %v992
      %v1104 = vpop.f32.mrf.mxu0
      %v1105 = vadd.f32 %v934, %v1104
      %1106 = vmatmul.f32.gmra.mxu0 %v995
      %v1107 = vpop.f32.mrf.mxu0
      %v1108 = vadd.f32 %v934, %v1107
      %1109 = vmatmul.f32.gmra.mxu0 %v998
      %v1110 = vpop.f32.mrf.mxu0
      %v1111 = vadd.f32 %v934, %v1110
      %1112 = vmatmul.f32.gmra.mxu0 %v1001
      %v1113 = vpop.f32.mrf.mxu0
      %v1114 = vadd.f32 %v934, %v1113
      %1115 = vmatmul.f32.gmra.mxu0 %v1004
      %v1116 = vpop.f32.mrf.mxu0
      %v1117 = vadd.f32 %v934, %v1116
      %1118 = vmatmul.f32.gmra.mxu0 %v1007
      %v1119 = vpop.f32.mrf.mxu0
      %v1120 = vadd.f32 %v934, %v1119
      %1121 = vmatmul.f32.gmra.mxu0 %v1010
      %v1122 = vpop.f32.mrf.mxu0
      %v1123 = vadd.f32 %v934, %v1122
      %1124 = vmatmul.f32.gmra.mxu0 %v1013
      %v1125 = vpop.f32.mrf.mxu0
      %v1126 = vadd.f32 %v934, %v1125
      %1127 = vmatmul.f32.gmra.mxu0 %v1016
      %v1128 = vpop.f32.mrf.mxu0
      %v1129 = vadd.f32 %v934, %v1128
      %1130 = vmatmul.f32.gmra.mxu0 %v1019
      %v1131 = vpop.f32.mrf.mxu0
      %v1132 = vadd.f32 %v934, %v1131
      %1133 = vmatmul.f32.gmra.mxu0 %v1022
      %v1134 = vpop.f32.mrf.mxu0
      %v1135 = vadd.f32 %v934, %v1134
      %1136 = vmatmul.f32.gmra.mxu0 %v1025
      %v1137 = vpop.f32.mrf.mxu0
      %v1138 = vadd.f32 %v934, %v1137
      %1139 = vmatmul.f32.gmra.mxu0 %v1028
      %v1140 = vpop.f32.mrf.mxu0
      %v1141 = vadd.f32 %v934, %v1140
      %1142 = vmatmul.f32.gmra.mxu0 %v1031
      %v1143 = vpop.f32.mrf.mxu0
      %v1144 = vadd.f32 %v934, %v1143
      %1145 = vdwg.mxu0
      %1146 = vst.msk [vmem:[%s318] sm:$0xff] %vm826, %v1051
      %1147 = vst.msk [vmem:[%s318 + $0x8] sm:$0xff] %vm826, %v1054
      %1148 = vst.msk [vmem:[%s318 + $0x10] sm:$0xff] %vm826, %v1057
      %1149 = vst.msk [vmem:[%s318 + $0x18] sm:$0xff] %vm826, %v1060
      %1150 = vst.msk [vmem:[%s318 + $0x20] sm:$0xff] %vm826, %v1063
      %1151 = vst.msk [vmem:[%s318 + $0x28] sm:$0xff] %vm826, %v1066
      %1152 = vst.msk [vmem:[%s318 + $0x30] sm:$0xff] %vm826, %v1069
      %1153 = vst.msk [vmem:[%s318 + $0x38] sm:$0xff] %vm826, %v1072
      %1154 = vst.msk [vmem:[%s318 + $0x40] sm:$0xff] %vm826, %v1075
      %1155 = vst.msk [vmem:[%s318 + $0x48] sm:$0xff] %vm826, %v1078
      %1156 = vst.msk [vmem:[%s318 + $0x50] sm:$0xff] %vm826, %v1081
      %1157 = vst.msk [vmem:[%s318 + $0x58] sm:$0xff] %vm826, %v1084
      %1158 = vst.msk [vmem:[%s318 + $0x60] sm:$0xff] %vm826, %v1087
      %1159 = vst.msk [vmem:[%s318 + $0x68] sm:$0xff] %vm826, %v1090
      %1160 = vst.msk [vmem:[%s318 + $0x70] sm:$0xff] %vm826, %v1093
      %1161 = vst.msk [vmem:[%s318 + $0x78] sm:$0xff] %vm826, %v1096
      %1162 = vst.msk [vmem:[%s318 + $0x80] sm:$0xff] %vm826, %v1099
      %1163 = vst.msk [vmem:[%s318 + $0x88] sm:$0xff] %vm826, %v1102
      %1164 = vst.msk [vmem:[%s318 + $0x90] sm:$0xff] %vm826, %v1105
      %1165 = vst.msk [vmem:[%s318 + $0x98] sm:$0xff] %vm826, %v1108
      %1166 = vst.msk [vmem:[%s318 + $0xa0] sm:$0xff] %vm826, %v1111
      %1167 = vst.msk [vmem:[%s318 + $0xa8] sm:$0xff] %vm826, %v1114
      %1168 = vst.msk [vmem:[%s318 + $0xb0] sm:$0xff] %vm826, %v1117
      %1169 = vst.msk [vmem:[%s318 + $0xb8] sm:$0xff] %vm826, %v1120
      %1170 = vst.msk [vmem:[%s318 + $0xc0] sm:$0xff] %vm826, %v1123
      %1171 = vst.msk [vmem:[%s318 + $0xc8] sm:$0xff] %vm826, %v1126
      %1172 = vst.msk [vmem:[%s318 + $0xd0] sm:$0xff] %vm826, %v1129
      %1173 = vst.msk [vmem:[%s318 + $0xd8] sm:$0xff] %vm826, %v1132
      %1174 = vst.msk [vmem:[%s318 + $0xe0] sm:$0xff] %vm826, %v1135
      %1175 = vst.msk [vmem:[%s318 + $0xe8] sm:$0xff] %vm826, %v1138
      %1176 = vst.msk [vmem:[%s318 + $0xf0] sm:$0xff] %vm826, %v1141
      %1177 = vst.msk [vmem:[%s318 + $0xf8] sm:$0xff] %vm826, %v1144
      %s1178 = scalar_lea.vmem %s2, 32
      %v1179 = vld [vmem:[%s1178] sm:$0xff]
      %v1180 = vld [vmem:[%s1178 + $0x8] sm:$0xff]
      %v1182 = vsel %vm936, %v929, 0
      %v1185 = vsel %vm936, %v930, 0
      %1187 = vmatpush.msra.mxu0 0.0
      %1188 = vmatpush.msra.mxu0 0.0
      %1189 = vmatpush.msra.mxu0 0.0
      %1190 = vmatpush.msra.mxu0 0.0
      %1191 = vmatpush.msra.mxu0 0.0
      %1192 = vmatpush.msra.mxu0 0.0
      %1193 = vmatpush.msra.mxu0 0.0
      %1194 = vmatpush.msra.mxu0 0.0
      %1195 = vmatpush.msra.mxu0 0.0
      %1196 = vmatpush.msra.mxu0 0.0
      %1197 = vmatpush.msra.mxu0 0.0
      %1198 = vmatpush.msra.mxu0 0.0
      %1199 = vmatpush.msra.mxu0 0.0
      %1200 = vmatpush.msra.mxu0 0.0
      %1201 = vmatpush.msra.mxu0 %v1180
      %1202 = vmatpush.msra.mxu0 %v1179
      %1203 = vmatmul.f32.gmra.mxu0 %v944
      %v1204 = vpop.f32.mrf.mxu0
      %v1205 = vadd.f32 %v934, %v1204
      %1206 = vmatmul.f32.gmra.mxu0 %v947
      %v1207 = vpop.f32.mrf.mxu0
      %v1208 = vadd.f32 %v934, %v1207
      %1209 = vmatmul.f32.gmra.mxu0 %v950
      %v1210 = vpop.f32.mrf.mxu0
      %v1211 = vadd.f32 %v934, %v1210
      %1212 = vmatmul.f32.gmra.mxu0 %v953
      %v1213 = vpop.f32.mrf.mxu0
      %v1214 = vadd.f32 %v934, %v1213
      %1215 = vmatmul.f32.gmra.mxu0 %v956
      %v1216 = vpop.f32.mrf.mxu0
      %v1217 = vadd.f32 %v934, %v1216
      %1218 = vmatmul.f32.gmra.mxu0 %v959
      %v1219 = vpop.f32.mrf.mxu0
      %v1220 = vadd.f32 %v934, %v1219
      %1221 = vmatmul.f32.gmra.mxu0 %v962
      %v1222 = vpop.f32.mrf.mxu0
      %v1223 = vadd.f32 %v934, %v1222
      %1224 = vmatmul.f32.gmra.mxu0 %v965
      %v1225 = vpop.f32.mrf.mxu0
      %v1226 = vadd.f32 %v934, %v1225
      %1227 = vmatmul.f32.gmra.mxu0 %v968
      %v1228 = vpop.f32.mrf.mxu0
      %v1229 = vadd.f32 %v934, %v1228
      %1230 = vmatmul.f32.gmra.mxu0 %v971
      %v1231 = vpop.f32.mrf.mxu0
      %v1232 = vadd.f32 %v934, %v1231
      %1233 = vmatmul.f32.gmra.mxu0 %v974
      %v1234 = vpop.f32.mrf.mxu0
      %v1235 = vadd.f32 %v934, %v1234
      %1236 = vmatmul.f32.gmra.mxu0 %v977
      %v1237 = vpop.f32.mrf.mxu0
      %v1238 = vadd.f32 %v934, %v1237
      %1239 = vmatmul.f32.gmra.mxu0 %v980
      %v1240 = vpop.f32.mrf.mxu0
      %v1241 = vadd.f32 %v934, %v1240
      %1242 = vmatmul.f32.gmra.mxu0 %v983
      %v1243 = vpop.f32.mrf.mxu0
      %v1244 = vadd.f32 %v934, %v1243
      %1245 = vmatmul.f32.gmra.mxu0 %v986
      %v1246 = vpop.f32.mrf.mxu0
      %v1247 = vadd.f32 %v934, %v1246
      %1248 = vmatmul.f32.gmra.mxu0 %v989
      %v1249 = vpop.f32.mrf.mxu0
      %v1250 = vadd.f32 %v934, %v1249
      %1251 = vmatmul.f32.gmra.mxu0 %v992
      %v1252 = vpop.f32.mrf.mxu0
      %v1253 = vadd.f32 %v934, %v1252
      %1254 = vmatmul.f32.gmra.mxu0 %v995
      %v1255 = vpop.f32.mrf.mxu0
      %v1256 = vadd.f32 %v934, %v1255
      %1257 = vmatmul.f32.gmra.mxu0 %v998
      %v1258 = vpop.f32.mrf.mxu0
      %v1259 = vadd.f32 %v934, %v1258
      %1260 = vmatmul.f32.gmra.mxu0 %v1001
      %v1261 = vpop.f32.mrf.mxu0
      %v1262 = vadd.f32 %v934, %v1261
      %1263 = vmatmul.f32.gmra.mxu0 %v1004
      %v1264 = vpop.f32.mrf.mxu0
      %v1265 = vadd.f32 %v934, %v1264
      %1266 = vmatmul.f32.gmra.mxu0 %v1007
      %v1267 = vpop.f32.mrf.mxu0
      %v1268 = vadd.f32 %v934, %v1267
      %1269 = vmatmul.f32.gmra.mxu0 %v1010
      %v1270 = vpop.f32.mrf.mxu0
      %v1271 = vadd.f32 %v934, %v1270
      %1272 = vmatmul.f32.gmra.mxu0 %v1013
      %v1273 = vpop.f32.mrf.mxu0
      %v1274 = vadd.f32 %v934, %v1273
      %1275 = vmatmul.f32.gmra.mxu0 %v1016
      %v1276 = vpop.f32.mrf.mxu0
      %v1277 = vadd.f32 %v934, %v1276
      %1278 = vmatmul.f32.gmra.mxu0 %v1019
      %v1279 = vpop.f32.mrf.mxu0
      %v1280 = vadd.f32 %v934, %v1279
      %1281 = vmatmul.f32.gmra.mxu0 %v1022
      %v1282 = vpop.f32.mrf.mxu0
      %v1283 = vadd.f32 %v934, %v1282
      %1284 = vmatmul.f32.gmra.mxu0 %v1025
      %v1285 = vpop.f32.mrf.mxu0
      %v1286 = vadd.f32 %v934, %v1285
      %1287 = vmatmul.f32.gmra.mxu0 %v1028
      %v1288 = vpop.f32.mrf.mxu0
      %v1289 = vadd.f32 %v934, %v1288
      %1290 = vmatmul.f32.gmra.mxu0 %v1031
      %v1291 = vpop.f32.mrf.mxu0
      %v1292 = vadd.f32 %v934, %v1291
      %1293 = vmatmul.f32.gmra.mxu0 %v1182
      %v1294 = vpop.f32.mrf.mxu0
      %v1295 = vadd.f32 %v934, %v1294
      %1296 = vmatmul.f32.gmra.mxu0 %v1185
      %v1297 = vpop.f32.mrf.mxu0
      %v1298 = vadd.f32 %v934, %v1297
      %1299 = vdwg.mxu0
      %s1300 = scalar_lea.vmem %s318, 512
      %1301 = vst.msk [vmem:[%s1300] sm:$0xff] %vm826, %v1205
      %1302 = vst.msk [vmem:[%s1300 + $0x8] sm:$0xff] %vm826, %v1208
      %1303 = vst.msk [vmem:[%s1300 + $0x10] sm:$0xff] %vm826, %v1211
      %1304 = vst.msk [vmem:[%s1300 + $0x18] sm:$0xff] %vm826, %v1214
      %1305 = vst.msk [vmem:[%s1300 + $0x20] sm:$0xff] %vm826, %v1217
      %1306 = vst.msk [vmem:[%s1300 + $0x28] sm:$0xff] %vm826, %v1220
      %1307 = vst.msk [vmem:[%s1300 + $0x30] sm:$0xff] %vm826, %v1223
      %1308 = vst.msk [vmem:[%s1300 + $0x38] sm:$0xff] %vm826, %v1226
      %1309 = vst.msk [vmem:[%s1300 + $0x40] sm:$0xff] %vm826, %v1229
      %1310 = vst.msk [vmem:[%s1300 + $0x48] sm:$0xff] %vm826, %v1232
      %1311 = vst.msk [vmem:[%s1300 + $0x50] sm:$0xff] %vm826, %v1235
      %1312 = vst.msk [vmem:[%s1300 + $0x58] sm:$0xff] %vm826, %v1238
      %1313 = vst.msk [vmem:[%s1300 + $0x60] sm:$0xff] %vm826, %v1241
      %1314 = vst.msk [vmem:[%s1300 + $0x68] sm:$0xff] %vm826, %v1244
      %1315 = vst.msk [vmem:[%s1300 + $0x70] sm:$0xff] %vm826, %v1247
      %1316 = vst.msk [vmem:[%s1300 + $0x78] sm:$0xff] %vm826, %v1250
      %1317 = vst.msk [vmem:[%s1300 + $0x80] sm:$0xff] %vm826, %v1253
      %1318 = vst.msk [vmem:[%s1300 + $0x88] sm:$0xff] %vm826, %v1256
      %1319 = vst.msk [vmem:[%s1300 + $0x90] sm:$0xff] %vm826, %v1259
      %1320 = vst.msk [vmem:[%s1300 + $0x98] sm:$0xff] %vm826, %v1262
      %1321 = vst.msk [vmem:[%s1300 + $0xa0] sm:$0xff] %vm826, %v1265
      %1322 = vst.msk [vmem:[%s1300 + $0xa8] sm:$0xff] %vm826, %v1268
      %1323 = vst.msk [vmem:[%s1300 + $0xb0] sm:$0xff] %vm826, %v1271
      %1324 = vst.msk [vmem:[%s1300 + $0xb8] sm:$0xff] %vm826, %v1274
      %1325 = vst.msk [vmem:[%s1300 + $0xc0] sm:$0xff] %vm826, %v1277
      %1326 = vst.msk [vmem:[%s1300 + $0xc8] sm:$0xff] %vm826, %v1280
      %1327 = vst.msk [vmem:[%s1300 + $0xd0] sm:$0xff] %vm826, %v1283
      %1328 = vst.msk [vmem:[%s1300 + $0xd8] sm:$0xff] %vm826, %v1286
      %1329 = vst.msk [vmem:[%s1300 + $0xe0] sm:$0xff] %vm826, %v1289
      %1330 = vst.msk [vmem:[%s1300 + $0xe8] sm:$0xff] %vm826, %v1292
      %1331 = vst.msk [vmem:[%s1300 + $0xf0] sm:$0xff] %vm826, %v1295
      %1332 = vst.msk [vmem:[%s1300 + $0xf8] sm:$0xff] %vm826, %v1298
      %1333 = vrot.lane.b32.xlu0 %v430, 4
      %v1334 = vpop.permute.xlu0 %1333
      %1335 = vrot.lane.b32.xlu0 %v435, 4
      %v1336 = vpop.permute.xlu0 %1335
      %1337 = vrot.lane.b32.xlu0 %v440, 4
      %v1338 = vpop.permute.xlu0 %1337
      %1339 = vrot.lane.b32.xlu0 %v445, 4
      %v1340 = vpop.permute.xlu0 %1339
      %1341 = vrot.lane.b32.xlu0 %v450, 4
      %v1342 = vpop.permute.xlu0 %1341
      %1343 = vrot.lane.b32.xlu0 %v455, 4
      %v1344 = vpop.permute.xlu0 %1343
      %1345 = vrot.lane.b32.xlu0 %v460, 4
      %v1346 = vpop.permute.xlu0 %1345
      %1347 = vrot.lane.b32.xlu0 %v465, 4
      %v1348 = vpop.permute.xlu0 %1347
      %1349 = vrot.lane.b32.xlu0 %v470, 4
      %v1350 = vpop.permute.xlu0 %1349
      %1351 = vrot.lane.b32.xlu0 %v475, 4
      %v1352 = vpop.permute.xlu0 %1351
      %1353 = vrot.lane.b32.xlu0 %v480, 4
      %v1354 = vpop.permute.xlu0 %1353
      %1355 = vrot.lane.b32.xlu0 %v485, 4
      %v1356 = vpop.permute.xlu0 %1355
      %1357 = vrot.lane.b32.xlu0 %v490, 4
      %v1358 = vpop.permute.xlu0 %1357
      %1359 = vrot.lane.b32.xlu0 %v495, 4
      %v1360 = vpop.permute.xlu0 %1359
      %1361 = vrot.lane.b32.xlu0 %v500, 4
      %v1362 = vpop.permute.xlu0 %1361
      %1363 = vrot.lane.b32.xlu0 %v505, 4
      %v1364 = vpop.permute.xlu0 %1363
      %1365 = vrot.lane.b32.xlu0 %v510, 4
      %v1366 = vpop.permute.xlu0 %1365
      %1384 = vrot.lane.b32.xlu0 %v325, 8
      %v1385 = vpop.permute.xlu0 %1384
      %1386 = vrot.lane.b32.xlu0 %v328, 8
      %v1387 = vpop.permute.xlu0 %1386
      %1388 = vrot.lane.b32.xlu0 %v331, 8
      %v1389 = vpop.permute.xlu0 %1388
      %1390 = vrot.lane.b32.xlu0 %v334, 8
      %v1391 = vpop.permute.xlu0 %1390
      %1392 = vrot.lane.b32.xlu0 %v337, 8
      %v1393 = vpop.permute.xlu0 %1392
      %1394 = vrot.lane.b32.xlu0 %v340, 8
      %v1395 = vpop.permute.xlu0 %1394
      %1396 = vrot.lane.b32.xlu0 %v343, 8
      %v1397 = vpop.permute.xlu0 %1396
      %1398 = vrot.lane.b32.xlu0 %v346, 8
      %v1399 = vpop.permute.xlu0 %1398
      %1400 = vrot.lane.b32.xlu0 %v349, 8
      %v1401 = vpop.permute.xlu0 %1400
      %1402 = vrot.lane.b32.xlu0 %v352, 8
      %v1403 = vpop.permute.xlu0 %1402
      %1404 = vrot.lane.b32.xlu0 %v355, 8
      %v1405 = vpop.permute.xlu0 %1404
      %1406 = vrot.lane.b32.xlu0 %v358, 8
      %v1407 = vpop.permute.xlu0 %1406
      %1408 = vrot.lane.b32.xlu0 %v361, 8
      %v1409 = vpop.permute.xlu0 %1408
      %1410 = vrot.lane.b32.xlu0 %v364, 8
      %v1411 = vpop.permute.xlu0 %1410
      %1412 = vrot.lane.b32.xlu0 %v367, 8
      %v1413 = vpop.permute.xlu0 %1412
      %1414 = vrot.lane.b32.xlu0 %v370, 8
      %v1415 = vpop.permute.xlu0 %1414
      %1416 = vrot.lane.b32.xlu0 %v373, 8
      %v1417 = vpop.permute.xlu0 %1416
      %1435 = vrot.lane.b32.xlu0 %v435, 12
      %v1436 = vpop.permute.xlu0 %1435
      %1437 = vrot.lane.b32.xlu0 %v440, 12
      %v1438 = vpop.permute.xlu0 %1437
      %1439 = vrot.lane.b32.xlu0 %v445, 12
      %v1440 = vpop.permute.xlu0 %1439
      %1441 = vrot.lane.b32.xlu0 %v450, 12
      %v1442 = vpop.permute.xlu0 %1441
      %1443 = vrot.lane.b32.xlu0 %v455, 12
      %v1444 = vpop.permute.xlu0 %1443
      %1445 = vrot.lane.b32.xlu0 %v460, 12
      %v1446 = vpop.permute.xlu0 %1445
      %1447 = vrot.lane.b32.xlu0 %v465, 12
      %v1448 = vpop.permute.xlu0 %1447
      %1449 = vrot.lane.b32.xlu0 %v470, 12
      %v1450 = vpop.permute.xlu0 %1449
      %1451 = vrot.lane.b32.xlu0 %v475, 12
      %v1452 = vpop.permute.xlu0 %1451
      %1453 = vrot.lane.b32.xlu0 %v480, 12
      %v1454 = vpop.permute.xlu0 %1453
      %1455 = vrot.lane.b32.xlu0 %v485, 12
      %v1456 = vpop.permute.xlu0 %1455
      %1457 = vrot.lane.b32.xlu0 %v490, 12
      %v1458 = vpop.permute.xlu0 %1457
      %1459 = vrot.lane.b32.xlu0 %v495, 12
      %v1460 = vpop.permute.xlu0 %1459
      %1461 = vrot.lane.b32.xlu0 %v500, 12
      %v1462 = vpop.permute.xlu0 %1461
      %1463 = vrot.lane.b32.xlu0 %v505, 12
      %v1464 = vpop.permute.xlu0 %1463
      %1465 = vrot.lane.b32.xlu0 %v510, 12
      %v1466 = vpop.permute.xlu0 %1465
      %1467 = vrot.lane.b32.xlu0 %v722, 12
      %v1468 = vpop.permute.xlu0 %1467
      %v1486 = vsel %vm826, %v322, %v1334
      %v1487 = vsel %vm826, %v325, %v1336
      %v1488 = vsel %vm826, %v328, %v1338
      %v1489 = vsel %vm826, %v331, %v1340
      %v1490 = vsel %vm826, %v334, %v1342
      %v1491 = vsel %vm826, %v337, %v1344
      %v1492 = vsel %vm826, %v340, %v1346
      %v1493 = vsel %vm826, %v343, %v1348
      %v1494 = vsel %vm826, %v346, %v1350
      %v1495 = vsel %vm826, %v349, %v1352
      %v1496 = vsel %vm826, %v352, %v1354
      %v1497 = vsel %vm826, %v355, %v1356
      %v1498 = vsel %vm826, %v358, %v1358
      %v1499 = vsel %vm826, %v361, %v1360
      %v1500 = vsel %vm826, %v364, %v1362
      %v1501 = vsel %vm826, %v367, %v1364
      %v1502 = vsel %vm826, %v370, %v1366
      %v1503 = vsel %vm861, %v1486, %v1385
      %v1504 = vsel %vm861, %v1487, %v1387
      %v1505 = vsel %vm861, %v1488, %v1389
      %v1506 = vsel %vm861, %v1489, %v1391
      %v1507 = vsel %vm861, %v1490, %v1393
      %v1508 = vsel %vm861, %v1491, %v1395
      %v1509 = vsel %vm861, %v1492, %v1397
      %v1510 = vsel %vm861, %v1493, %v1399
      %v1511 = vsel %vm861, %v1494, %v1401
      %v1512 = vsel %vm861, %v1495, %v1403
      %v1513 = vsel %vm861, %v1496, %v1405
      %v1514 = vsel %vm861, %v1497, %v1407
      %v1515 = vsel %vm861, %v1498, %v1409
      %v1516 = vsel %vm861, %v1499, %v1411
      %v1517 = vsel %vm861, %v1500, %v1413
      %v1518 = vsel %vm861, %v1501, %v1415
      %v1519 = vsel %vm861, %v1502, %v1417
      %v1520 = vsel %vm896, %v1503, %v1436
      %v1521 = vsel %vm896, %v1504, %v1438
      %v1522 = vsel %vm896, %v1505, %v1440
      %v1523 = vsel %vm896, %v1506, %v1442
      %v1524 = vsel %vm896, %v1507, %v1444
      %v1525 = vsel %vm896, %v1508, %v1446
      %v1526 = vsel %vm896, %v1509, %v1448
      %v1527 = vsel %vm896, %v1510, %v1450
      %v1528 = vsel %vm896, %v1511, %v1452
      %v1529 = vsel %vm896, %v1512, %v1454
      %v1530 = vsel %vm896, %v1513, %v1456
      %v1531 = vsel %vm896, %v1514, %v1458
      %v1532 = vsel %vm896, %v1515, %v1460
      %v1533 = vsel %vm896, %v1516, %v1462
      %v1534 = vsel %vm896, %v1517, %v1464
      %v1535 = vsel %vm896, %v1518, %v1466
      %v1536 = vsel %vm896, %v1519, %v1468
      %v1553 = vrot.slane %v897, 1
      %v1554 = vrot.slane %v898, 1
      %v1555 = vsel %vm426, %v1553, %v1554
      %v1556 = vrot.slane %v1520, 1
      %v1557 = vsel %vm426, %v1554, %v1556
      %v1558 = vrot.slane %v899, 1
      %v1559 = vrot.slane %v900, 1
      %v1560 = vsel %vm426, %v1558, %v1559
      %v1561 = vrot.slane %v1521, 1
      %v1562 = vsel %vm426, %v1559, %v1561
      %v1563 = vrot.slane %v901, 1
      %v1564 = vrot.slane %v902, 1
      %v1565 = vsel %vm426, %v1563, %v1564
      %v1566 = vrot.slane %v1522, 1
      %v1567 = vsel %vm426, %v1564, %v1566
      %v1568 = vrot.slane %v903, 1
      %v1569 = vrot.slane %v904, 1
      %v1570 = vsel %vm426, %v1568, %v1569
      %v1571 = vrot.slane %v1523, 1
      %v1572 = vsel %vm426, %v1569, %v1571
      %v1573 = vrot.slane %v905, 1
      %v1574 = vrot.slane %v906, 1
      %v1575 = vsel %vm426, %v1573, %v1574
      %v1576 = vrot.slane %v1524, 1
      %v1577 = vsel %vm426, %v1574, %v1576
      %v1578 = vrot.slane %v907, 1
      %v1579 = vrot.slane %v908, 1
      %v1580 = vsel %vm426, %v1578, %v1579
      %v1581 = vrot.slane %v1525, 1
      %v1582 = vsel %vm426, %v1579, %v1581
      %v1583 = vrot.slane %v909, 1
      %v1584 = vrot.slane %v910, 1
      %v1585 = vsel %vm426, %v1583, %v1584
      %v1586 = vrot.slane %v1526, 1
      %v1587 = vsel %vm426, %v1584, %v1586
      %v1588 = vrot.slane %v911, 1
      %v1589 = vrot.slane %v912, 1
      %v1590 = vsel %vm426, %v1588, %v1589
      %v1591 = vrot.slane %v1527, 1
      %v1592 = vsel %vm426, %v1589, %v1591
      %v1593 = vrot.slane %v913, 1
      %v1594 = vrot.slane %v914, 1
      %v1595 = vsel %vm426, %v1593, %v1594
      %v1596 = vrot.slane %v1528, 1
      %v1597 = vsel %vm426, %v1594, %v1596
      %v1598 = vrot.slane %v915, 1
      %v1599 = vrot.slane %v916, 1
      %v1600 = vsel %vm426, %v1598, %v1599
      %v1601 = vrot.slane %v1529, 1
      %v1602 = vsel %vm426, %v1599, %v1601
      %v1603 = vrot.slane %v917, 1
      %v1604 = vrot.slane %v918, 1
      %v1605 = vsel %vm426, %v1603, %v1604
      %v1606 = vrot.slane %v1530, 1
      %v1607 = vsel %vm426, %v1604, %v1606
      %v1608 = vrot.slane %v919, 1
      %v1609 = vrot.slane %v920, 1
      %v1610 = vsel %vm426, %v1608, %v1609
      %v1611 = vrot.slane %v1531, 1
      %v1612 = vsel %vm426, %v1609, %v1611
      %v1613 = vrot.slane %v921, 1
      %v1614 = vrot.slane %v922, 1
      %v1615 = vsel %vm426, %v1613, %v1614
      %v1616 = vrot.slane %v1532, 1
      %v1617 = vsel %vm426, %v1614, %v1616
      %v1618 = vrot.slane %v923, 1
      %v1619 = vrot.slane %v924, 1
      %v1620 = vsel %vm426, %v1618, %v1619
      %v1621 = vrot.slane %v1533, 1
      %v1622 = vsel %vm426, %v1619, %v1621
      %v1623 = vrot.slane %v925, 1
      %v1624 = vrot.slane %v926, 1
      %v1625 = vsel %vm426, %v1623, %v1624
      %v1626 = vrot.slane %v1534, 1
      %v1627 = vsel %vm426, %v1624, %v1626
      %v1628 = vrot.slane %v927, 1
      %v1629 = vrot.slane %v928, 1
      %v1630 = vsel %vm426, %v1628, %v1629
      %v1631 = vrot.slane %v1535, 1
      %v1632 = vsel %vm426, %v1629, %v1631
      %s1633 = scalar_lea.vmem %s2, 16
      %v1634 = vld [vmem:[%s1633] sm:$0xff]
      %v1635 = vld [vmem:[%s1633 + $0x8] sm:$0xff]
      %v1636 = vsel %vm936, %v1555, 0
      %v1638 = vsel %vm936, %v1557, 0
      %v1640 = vsel %vm936, %v1560, 0
      %v1642 = vsel %vm936, %v1562, 0
      %v1644 = vsel %vm936, %v1565, 0
      %v1646 = vsel %vm936, %v1567, 0
      %v1648 = vsel %vm936, %v1570, 0
      %v1650 = vsel %vm936, %v1572, 0
      %v1652 = vsel %vm936, %v1575, 0
      %v1654 = vsel %vm936, %v1577, 0
      %v1656 = vsel %vm936, %v1580, 0
      %v1658 = vsel %vm936, %v1582, 0
      %v1660 = vsel %vm936, %v1585, 0
      %v1662 = vsel %vm936, %v1587, 0
      %v1664 = vsel %vm936, %v1590, 0
      %v1666 = vsel %vm936, %v1592, 0
      %v1668 = vsel %vm936, %v1595, 0
      %v1670 = vsel %vm936, %v1597, 0
      %v1672 = vsel %vm936, %v1600, 0
      %v1674 = vsel %vm936, %v1602, 0
      %v1676 = vsel %vm936, %v1605, 0
      %v1678 = vsel %vm936, %v1607, 0
      %v1680 = vsel %vm936, %v1610, 0
      %v1682 = vsel %vm936, %v1612, 0
      %v1684 = vsel %vm936, %v1615, 0
      %v1686 = vsel %vm936, %v1617, 0
      %v1688 = vsel %vm936, %v1620, 0
      %v1690 = vsel %vm936, %v1622, 0
      %v1692 = vsel %vm936, %v1625, 0
      %v1694 = vsel %vm936, %v1627, 0
      %v1696 = vsel %vm936, %v1630, 0
      %v1698 = vsel %vm936, %v1632, 0
      %1700 = vmatpush.msra.mxu0 0.0
      %1701 = vmatpush.msra.mxu0 0.0
      %1702 = vmatpush.msra.mxu0 0.0
      %1703 = vmatpush.msra.mxu0 0.0
      %1704 = vmatpush.msra.mxu0 0.0
      %1705 = vmatpush.msra.mxu0 0.0
      %1706 = vmatpush.msra.mxu0 0.0
      %1707 = vmatpush.msra.mxu0 0.0
      %1708 = vmatpush.msra.mxu0 0.0
      %1709 = vmatpush.msra.mxu0 0.0
      %1710 = vmatpush.msra.mxu0 0.0
      %1711 = vmatpush.msra.mxu0 0.0
      %1712 = vmatpush.msra.mxu0 0.0
      %1713 = vmatpush.msra.mxu0 0.0
      %1714 = vmatpush.msra.mxu0 %v1635
      %1715 = vmatpush.msra.mxu0 %v1634
      %1716 = vmatmul.f32.gmra.mxu0 %v1636
      %v1717 = vpop.f32.mrf.mxu0
      %v1718 = vadd.f32 %v934, %v1717
      %1719 = vmatmul.f32.gmra.mxu0 %v1638
      %v1720 = vpop.f32.mrf.mxu0
      %v1721 = vadd.f32 %v934, %v1720
      %1722 = vmatmul.f32.gmra.mxu0 %v1640
      %v1723 = vpop.f32.mrf.mxu0
      %v1724 = vadd.f32 %v934, %v1723
      %1725 = vmatmul.f32.gmra.mxu0 %v1642
      %v1726 = vpop.f32.mrf.mxu0
      %v1727 = vadd.f32 %v934, %v1726
      %1728 = vmatmul.f32.gmra.mxu0 %v1644
      %v1729 = vpop.f32.mrf.mxu0
      %v1730 = vadd.f32 %v934, %v1729
      %1731 = vmatmul.f32.gmra.mxu0 %v1646
      %v1732 = vpop.f32.mrf.mxu0
      %v1733 = vadd.f32 %v934, %v1732
      %1734 = vmatmul.f32.gmra.mxu0 %v1648
      %v1735 = vpop.f32.mrf.mxu0
      %v1736 = vadd.f32 %v934, %v1735
      %1737 = vmatmul.f32.gmra.mxu0 %v1650
      %v1738 = vpop.f32.mrf.mxu0
      %v1739 = vadd.f32 %v934, %v1738
      %1740 = vmatmul.f32.gmra.mxu0 %v1652
      %v1741 = vpop.f32.mrf.mxu0
      %v1742 = vadd.f32 %v934, %v1741
      %1743 = vmatmul.f32.gmra.mxu0 %v1654
      %v1744 = vpop.f32.mrf.mxu0
      %v1745 = vadd.f32 %v934, %v1744
      %1746 = vmatmul.f32.gmra.mxu0 %v1656
      %v1747 = vpop.f32.mrf.mxu0
      %v1748 = vadd.f32 %v934, %v1747
      %1749 = vmatmul.f32.gmra.mxu0 %v1658
      %v1750 = vpop.f32.mrf.mxu0
      %v1751 = vadd.f32 %v934, %v1750
      %1752 = vmatmul.f32.gmra.mxu0 %v1660
      %v1753 = vpop.f32.mrf.mxu0
      %v1754 = vadd.f32 %v934, %v1753
      %1755 = vmatmul.f32.gmra.mxu0 %v1662
      %v1756 = vpop.f32.mrf.mxu0
      %v1757 = vadd.f32 %v934, %v1756
      %1758 = vmatmul.f32.gmra.mxu0 %v1664
      %v1759 = vpop.f32.mrf.mxu0
      %v1760 = vadd.f32 %v934, %v1759
      %1761 = vmatmul.f32.gmra.mxu0 %v1666
      %v1762 = vpop.f32.mrf.mxu0
      %v1763 = vadd.f32 %v934, %v1762
      %1764 = vmatmul.f32.gmra.mxu0 %v1668
      %v1765 = vpop.f32.mrf.mxu0
      %v1766 = vadd.f32 %v934, %v1765
      %1767 = vmatmul.f32.gmra.mxu0 %v1670
      %v1768 = vpop.f32.mrf.mxu0
      %v1769 = vadd.f32 %v934, %v1768
      %1770 = vmatmul.f32.gmra.mxu0 %v1672
      %v1771 = vpop.f32.mrf.mxu0
      %v1772 = vadd.f32 %v934, %v1771
      %1773 = vmatmul.f32.gmra.mxu0 %v1674
      %v1774 = vpop.f32.mrf.mxu0
      %v1775 = vadd.f32 %v934, %v1774
      %1776 = vmatmul.f32.gmra.mxu0 %v1676
      %v1777 = vpop.f32.mrf.mxu0
      %v1778 = vadd.f32 %v934, %v1777
      %1779 = vmatmul.f32.gmra.mxu0 %v1678
      %v1780 = vpop.f32.mrf.mxu0
      %v1781 = vadd.f32 %v934, %v1780
      %1782 = vmatmul.f32.gmra.mxu0 %v1680
      %v1783 = vpop.f32.mrf.mxu0
      %v1784 = vadd.f32 %v934, %v1783
      %1785 = vmatmul.f32.gmra.mxu0 %v1682
      %v1786 = vpop.f32.mrf.mxu0
      %v1787 = vadd.f32 %v934, %v1786
      %1788 = vmatmul.f32.gmra.mxu0 %v1684
      %v1789 = vpop.f32.mrf.mxu0
      %v1790 = vadd.f32 %v934, %v1789
      %1791 = vmatmul.f32.gmra.mxu0 %v1686
      %v1792 = vpop.f32.mrf.mxu0
      %v1793 = vadd.f32 %v934, %v1792
      %1794 = vmatmul.f32.gmra.mxu0 %v1688
      %v1795 = vpop.f32.mrf.mxu0
      %v1796 = vadd.f32 %v934, %v1795
      %1797 = vmatmul.f32.gmra.mxu0 %v1690
      %v1798 = vpop.f32.mrf.mxu0
      %v1799 = vadd.f32 %v934, %v1798
      %1800 = vmatmul.f32.gmra.mxu0 %v1692
      %v1801 = vpop.f32.mrf.mxu0
      %v1802 = vadd.f32 %v934, %v1801
      %1803 = vmatmul.f32.gmra.mxu0 %v1694
      %v1804 = vpop.f32.mrf.mxu0
      %v1805 = vadd.f32 %v934, %v1804
      %1806 = vmatmul.f32.gmra.mxu0 %v1696
      %v1807 = vpop.f32.mrf.mxu0
      %v1808 = vadd.f32 %v934, %v1807
      %1809 = vmatmul.f32.gmra.mxu0 %v1698
      %v1810 = vpop.f32.mrf.mxu0
      %v1811 = vadd.f32 %v934, %v1810
      %1812 = vdwg.mxu0
      %s1813 = scalar_lea.vmem %s318, 256
      %1814 = vst.msk [vmem:[%s1813] sm:$0xff] %vm826, %v1718
      %1815 = vst.msk [vmem:[%s1813 + $0x8] sm:$0xff] %vm826, %v1721
      %1816 = vst.msk [vmem:[%s1813 + $0x10] sm:$0xff] %vm826, %v1724
      %1817 = vst.msk [vmem:[%s1813 + $0x18] sm:$0xff] %vm826, %v1727
      %1818 = vst.msk [vmem:[%s1813 + $0x20] sm:$0xff] %vm826, %v1730
      %1819 = vst.msk [vmem:[%s1813 + $0x28] sm:$0xff] %vm826, %v1733
      %1820 = vst.msk [vmem:[%s1813 + $0x30] sm:$0xff] %vm826, %v1736
      %1821 = vst.msk [vmem:[%s1813 + $0x38] sm:$0xff] %vm826, %v1739
      %1822 = vst.msk [vmem:[%s1813 + $0x40] sm:$0xff] %vm826, %v1742
      %1823 = vst.msk [vmem:[%s1813 + $0x48] sm:$0xff] %vm826, %v1745
      %1824 = vst.msk [vmem:[%s1813 + $0x50] sm:$0xff] %vm826, %v1748
      %1825 = vst.msk [vmem:[%s1813 + $0x58] sm:$0xff] %vm826, %v1751
      %1826 = vst.msk [vmem:[%s1813 + $0x60] sm:$0xff] %vm826, %v1754
      %1827 = vst.msk [vmem:[%s1813 + $0x68] sm:$0xff] %vm826, %v1757
      %1828 = vst.msk [vmem:[%s1813 + $0x70] sm:$0xff] %vm826, %v1760
      %1829 = vst.msk [vmem:[%s1813 + $0x78] sm:$0xff] %vm826, %v1763
      %1830 = vst.msk [vmem:[%s1813 + $0x80] sm:$0xff] %vm826, %v1766
      %1831 = vst.msk [vmem:[%s1813 + $0x88] sm:$0xff] %vm826, %v1769
      %1832 = vst.msk [vmem:[%s1813 + $0x90] sm:$0xff] %vm826, %v1772
      %1833 = vst.msk [vmem:[%s1813 + $0x98] sm:$0xff] %vm826, %v1775
      %1834 = vst.msk [vmem:[%s1813 + $0xa0] sm:$0xff] %vm826, %v1778
      %1835 = vst.msk [vmem:[%s1813 + $0xa8] sm:$0xff] %vm826, %v1781
      %1836 = vst.msk [vmem:[%s1813 + $0xb0] sm:$0xff] %vm826, %v1784
      %1837 = vst.msk [vmem:[%s1813 + $0xb8] sm:$0xff] %vm826, %v1787
      %1838 = vst.msk [vmem:[%s1813 + $0xc0] sm:$0xff] %vm826, %v1790
      %1839 = vst.msk [vmem:[%s1813 + $0xc8] sm:$0xff] %vm826, %v1793
      %1840 = vst.msk [vmem:[%s1813 + $0xd0] sm:$0xff] %vm826, %v1796
      %1841 = vst.msk [vmem:[%s1813 + $0xd8] sm:$0xff] %vm826, %v1799
      %1842 = vst.msk [vmem:[%s1813 + $0xe0] sm:$0xff] %vm826, %v1802
      %1843 = vst.msk [vmem:[%s1813 + $0xe8] sm:$0xff] %vm826, %v1805
      %1844 = vst.msk [vmem:[%s1813 + $0xf0] sm:$0xff] %vm826, %v1808
      %1845 = vst.msk [vmem:[%s1813 + $0xf8] sm:$0xff] %vm826, %v1811
      %v1847 = vrot.slane %v929, 1
      %v1848 = vrot.slane %v930, 1
      %v1849 = vsel %vm426, %v1847, %v1848
      %v1850 = vrot.slane %v1536, 1
      %v1851 = vsel %vm426, %v1848, %v1850
      %s1852 = scalar_lea.vmem %s2, 48
      %v1853 = vld [vmem:[%s1852] sm:$0xff]
      %v1854 = vld [vmem:[%s1852 + $0x8] sm:$0xff]
      %v1855 = vsel %vm936, %v1849, 0
      %v1857 = vsel %vm936, %v1851, 0
      %1859 = vmatpush.msra.mxu0 0.0
      %1860 = vmatpush.msra.mxu0 0.0
      %1861 = vmatpush.msra.mxu0 0.0
      %1862 = vmatpush.msra.mxu0 0.0
      %1863 = vmatpush.msra.mxu0 0.0
      %1864 = vmatpush.msra.mxu0 0.0
      %1865 = vmatpush.msra.mxu0 0.0
      %1866 = vmatpush.msra.mxu0 0.0
      %1867 = vmatpush.msra.mxu0 0.0
      %1868 = vmatpush.msra.mxu0 0.0
      %1869 = vmatpush.msra.mxu0 0.0
      %1870 = vmatpush.msra.mxu0 0.0
      %1871 = vmatpush.msra.mxu0 0.0
      %1872 = vmatpush.msra.mxu0 0.0
      %1873 = vmatpush.msra.mxu0 %v1854
      %1874 = vmatpush.msra.mxu0 %v1853
      %1875 = vmatmul.f32.gmra.mxu0 %v1640
      %v1876 = vpop.f32.mrf.mxu0
      %v1877 = vadd.f32 %v934, %v1876
      %1878 = vmatmul.f32.gmra.mxu0 %v1642
      %v1879 = vpop.f32.mrf.mxu0
      %v1880 = vadd.f32 %v934, %v1879
      %1881 = vmatmul.f32.gmra.mxu0 %v1644
      %v1882 = vpop.f32.mrf.mxu0
      %v1883 = vadd.f32 %v934, %v1882
      %1884 = vmatmul.f32.gmra.mxu0 %v1646
      %v1885 = vpop.f32.mrf.mxu0
      %v1886 = vadd.f32 %v934, %v1885
      %1887 = vmatmul.f32.gmra.mxu0 %v1648
      %v1888 = vpop.f32.mrf.mxu0
      %v1889 = vadd.f32 %v934, %v1888
      %1890 = vmatmul.f32.gmra.mxu0 %v1650
      %v1891 = vpop.f32.mrf.mxu0
      %v1892 = vadd.f32 %v934, %v1891
      %1893 = vmatmul.f32.gmra.mxu0 %v1652
      %v1894 = vpop.f32.mrf.mxu0
      %v1895 = vadd.f32 %v934, %v1894
      %1896 = vmatmul.f32.gmra.mxu0 %v1654
      %v1897 = vpop.f32.mrf.mxu0
      %v1898 = vadd.f32 %v934, %v1897
      %1899 = vmatmul.f32.gmra.mxu0 %v1656
      %v1900 = vpop.f32.mrf.mxu0
      %v1901 = vadd.f32 %v934, %v1900
      %1902 = vmatmul.f32.gmra.mxu0 %v1658
      %v1903 = vpop.f32.mrf.mxu0
      %v1904 = vadd.f32 %v934, %v1903
      %1905 = vmatmul.f32.gmra.mxu0 %v1660
      %v1906 = vpop.f32.mrf.mxu0
      %v1907 = vadd.f32 %v934, %v1906
      %1908 = vmatmul.f32.gmra.mxu0 %v1662
      %v1909 = vpop.f32.mrf.mxu0
      %v1910 = vadd.f32 %v934, %v1909
      %1911 = vmatmul.f32.gmra.mxu0 %v1664
      %v1912 = vpop.f32.mrf.mxu0
      %v1913 = vadd.f32 %v934, %v1912
      %1914 = vmatmul.f32.gmra.mxu0 %v1666
      %v1915 = vpop.f32.mrf.mxu0
      %v1916 = vadd.f32 %v934, %v1915
      %1917 = vmatmul.f32.gmra.mxu0 %v1668
      %v1918 = vpop.f32.mrf.mxu0
      %v1919 = vadd.f32 %v934, %v1918
      %1920 = vmatmul.f32.gmra.mxu0 %v1670
      %v1921 = vpop.f32.mrf.mxu0
      %v1922 = vadd.f32 %v934, %v1921
      %1923 = vmatmul.f32.gmra.mxu0 %v1672
      %v1924 = vpop.f32.mrf.mxu0
      %v1925 = vadd.f32 %v934, %v1924
      %1926 = vmatmul.f32.gmra.mxu0 %v1674
      %v1927 = vpop.f32.mrf.mxu0
      %v1928 = vadd.f32 %v934, %v1927
      %1929 = vmatmul.f32.gmra.mxu0 %v1676
      %v1930 = vpop.f32.mrf.mxu0
      %v1931 = vadd.f32 %v934, %v1930
      %1932 = vmatmul.f32.gmra.mxu0 %v1678
      %v1933 = vpop.f32.mrf.mxu0
      %v1934 = vadd.f32 %v934, %v1933
      %1935 = vmatmul.f32.gmra.mxu0 %v1680
      %v1936 = vpop.f32.mrf.mxu0
      %v1937 = vadd.f32 %v934, %v1936
      %1938 = vmatmul.f32.gmra.mxu0 %v1682
      %v1939 = vpop.f32.mrf.mxu0
      %v1940 = vadd.f32 %v934, %v1939
      %1941 = vmatmul.f32.gmra.mxu0 %v1684
      %v1942 = vpop.f32.mrf.mxu0
      %v1943 = vadd.f32 %v934, %v1942
      %1944 = vmatmul.f32.gmra.mxu0 %v1686
      %v1945 = vpop.f32.mrf.mxu0
      %v1946 = vadd.f32 %v934, %v1945
      %1947 = vmatmul.f32.gmra.mxu0 %v1688
      %v1948 = vpop.f32.mrf.mxu0
      %v1949 = vadd.f32 %v934, %v1948
      %1950 = vmatmul.f32.gmra.mxu0 %v1690
      %v1951 = vpop.f32.mrf.mxu0
      %v1952 = vadd.f32 %v934, %v1951
      %1953 = vmatmul.f32.gmra.mxu0 %v1692
      %v1954 = vpop.f32.mrf.mxu0
      %v1955 = vadd.f32 %v934, %v1954
      %1956 = vmatmul.f32.gmra.mxu0 %v1694
      %v1957 = vpop.f32.mrf.mxu0
      %v1958 = vadd.f32 %v934, %v1957
      %1959 = vmatmul.f32.gmra.mxu0 %v1696
      %v1960 = vpop.f32.mrf.mxu0
      %v1961 = vadd.f32 %v934, %v1960
      %1962 = vmatmul.f32.gmra.mxu0 %v1698
      %v1963 = vpop.f32.mrf.mxu0
      %v1964 = vadd.f32 %v934, %v1963
      %1965 = vmatmul.f32.gmra.mxu0 %v1855
      %v1966 = vpop.f32.mrf.mxu0
      %v1967 = vadd.f32 %v934, %v1966
      %1968 = vmatmul.f32.gmra.mxu0 %v1857
      %v1969 = vpop.f32.mrf.mxu0
      %v1970 = vadd.f32 %v934, %v1969
      %1971 = vdwg.mxu0
      %s1972 = scalar_lea.vmem %s318, 768
      %1973 = vst.msk [vmem:[%s1972] sm:$0xff] %vm826, %v1877
      %1974 = vst.msk [vmem:[%s1972 + $0x8] sm:$0xff] %vm826, %v1880
      %1975 = vst.msk [vmem:[%s1972 + $0x10] sm:$0xff] %vm826, %v1883
      %1976 = vst.msk [vmem:[%s1972 + $0x18] sm:$0xff] %vm826, %v1886
      %1977 = vst.msk [vmem:[%s1972 + $0x20] sm:$0xff] %vm826, %v1889
      %1978 = vst.msk [vmem:[%s1972 + $0x28] sm:$0xff] %vm826, %v1892
      %1979 = vst.msk [vmem:[%s1972 + $0x30] sm:$0xff] %vm826, %v1895
      %1980 = vst.msk [vmem:[%s1972 + $0x38] sm:$0xff] %vm826, %v1898
      %1981 = vst.msk [vmem:[%s1972 + $0x40] sm:$0xff] %vm826, %v1901
      %1982 = vst.msk [vmem:[%s1972 + $0x48] sm:$0xff] %vm826, %v1904
      %1983 = vst.msk [vmem:[%s1972 + $0x50] sm:$0xff] %vm826, %v1907
      %1984 = vst.msk [vmem:[%s1972 + $0x58] sm:$0xff] %vm826, %v1910
      %1985 = vst.msk [vmem:[%s1972 + $0x60] sm:$0xff] %vm826, %v1913
      %1986 = vst.msk [vmem:[%s1972 + $0x68] sm:$0xff] %vm826, %v1916
      %1987 = vst.msk [vmem:[%s1972 + $0x70] sm:$0xff] %vm826, %v1919
      %1988 = vst.msk [vmem:[%s1972 + $0x78] sm:$0xff] %vm826, %v1922
      %1989 = vst.msk [vmem:[%s1972 + $0x80] sm:$0xff] %vm826, %v1925
      %1990 = vst.msk [vmem:[%s1972 + $0x88] sm:$0xff] %vm826, %v1928
      %1991 = vst.msk [vmem:[%s1972 + $0x90] sm:$0xff] %vm826, %v1931
      %1992 = vst.msk [vmem:[%s1972 + $0x98] sm:$0xff] %vm826, %v1934
      %1993 = vst.msk [vmem:[%s1972 + $0xa0] sm:$0xff] %vm826, %v1937
      %1994 = vst.msk [vmem:[%s1972 + $0xa8] sm:$0xff] %vm826, %v1940
      %1995 = vst.msk [vmem:[%s1972 + $0xb0] sm:$0xff] %vm826, %v1943
      %1996 = vst.msk [vmem:[%s1972 + $0xb8] sm:$0xff] %vm826, %v1946
      %1997 = vst.msk [vmem:[%s1972 + $0xc0] sm:$0xff] %vm826, %v1949
      %1998 = vst.msk [vmem:[%s1972 + $0xc8] sm:$0xff] %vm826, %v1952
      %1999 = vst.msk [vmem:[%s1972 + $0xd0] sm:$0xff] %vm826, %v1955
      %2000 = vst.msk [vmem:[%s1972 + $0xd8] sm:$0xff] %vm826, %v1958
      %2001 = vst.msk [vmem:[%s1972 + $0xe0] sm:$0xff] %vm826, %v1961
      %2002 = vst.msk [vmem:[%s1972 + $0xe8] sm:$0xff] %vm826, %v1964
      %2003 = vst.msk [vmem:[%s1972 + $0xf0] sm:$0xff] %vm826, %v1967
      %2004 = vst.msk [vmem:[%s1972 + $0xf8] sm:$0xff] %vm826, %v1970
      %s2005 = smul.u32 16, %s20
      %p2006 = scmp.lt.s32.totalorder %s19, 1
      %s2007 = scalar_select %p2006, %s19, 1
      %p2008 = scmp.lt.s32.totalorder %s2005, 15
      %s2009 = scalar_select %p2008, %s2005, 15
      %s2010 = smul.addr %s2009, 2
      %s2011 = smul.addr %s2007, 128
      %s2012 = sadd.s32 %s2010, %s2011
      %s2013 = smul.addr %s2012, 8
      %s2014 = scalar_lea.vmem %s4, %s2013
      // Predicated region
      $region37: #{tpu_custom_call.1} parent=35 // pred_check
        %p2015 = pneg %p149
      $region38: #{tpu_custom_call.1} parent=35 // pred_check_branch
        %2017 = sbr.rel (%p2015) target = $region40
      $region39: #{tpu_custom_call.1} parent=35 // pred_region
        %s2018 = smul.u32 16, %s20
      $region40: #{tpu_custom_call.1} parent=35 // pred_fallthru
        _
    $region36: #{tpu_custom_call.1} parent=5 // pred_fallthru
      _
    %p2019 = scmp.le.s32.totalorder 2, %s10
    // Predicated region
    $region41: #{tpu_custom_call.1} parent=5 // pred_check
      %p2020 = pneg %p2019
    $region42: #{tpu_custom_call.1} parent=5 // pred_check_branch
      %2022 = sbr.rel (%p2020) target = $region44
    $region43: #{tpu_custom_call.1} parent=5 // pred_region
      %s2023 = ssub.s32 %s10, 2
      // Predicated region
      $region45: #{tpu_custom_call.1} parent=43 // pred_check
        %p2024 = pneg %p155
      $region46: #{tpu_custom_call.1} parent=43 // pred_check_branch
        %2026 = sbr.rel (%p2024) target = $region48
      $region47: #{tpu_custom_call.1} parent=43 // pred_region
        %s2027 = smul.u32 16, %s22
        %p2028 = scmp.lt.s32.totalorder %s21, 1
        %s2029 = scalar_select %p2028, %s21, 1
        %p2030 = scmp.lt.s32.totalorder %s2027, 15
        %s2031 = scalar_select %p2030, %s2027, 15
        %s2032 = smul.addr %s2031, 2
        %s2033 = smul.addr %s2029, 128
        %s2034 = sadd.s32 %s2032, %s2033
        %s2035 = smul.addr %s2034, 8
        %s2036 = scalar_lea.vmem %s4, %s2035
      $region48: #{tpu_custom_call.1} parent=43 // pred_fallthru
        _
    $region44: #{tpu_custom_call.1} parent=5 // pred_fallthru
      _
  $region6: #{tpu_custom_call.1} parent=0 // loop_footer
    %s14 = sadd.s32 1, %s10
  $region7: #{tpu_custom_call.1} parent=0 // loop_footer_branch
    %9 = sbr.rel target = $region3
  $region8: #{tpu_custom_call.1} parent=0 // loop_exit
    _

</llo_original>
